<compile_context>
chip_gen: v5e
topology: v5e:2x2
jax: 0.10.0
libtpu: 0.0.40
codegen_flags: <defaults>
</compile_context>

<pallas_src>
import math
import functools

import jax
import jax.numpy as jnp
from jax.experimental import pallas as pl
from jax.experimental.pallas import tpu as pltpu


# ---------------------------------------------------------------------------
# math helpers (f32 element-wise work)
# ---------------------------------------------------------------------------
def _layernorm(v, g, b, eps=1e-5):
    mu = jnp.mean(v, axis=-1, keepdims=True)
    var = jnp.mean((v - mu) ** 2, axis=-1, keepdims=True)   # biased var (PyTorch)
    return (v - mu) * jax.lax.rsqrt(var + eps) * g + b


def _gelu_exact(x):
    # nn.GELU() default = exact (erf) GELU
    return 0.5 * x * (1.0 + jax.lax.erf(x * (1.0 / math.sqrt(2.0))))


# ---------------------------------------------------------------------------
# Pallas kernel: one (batch, q-tile) grid point
# ---------------------------------------------------------------------------
def _transformer_block_kernel(n_heads, causal, has_mask, *args):
    if has_mask:
        x_q_ref, x_kv_ref, mask_ref = args[:3]
        rest = args[3:]
    else:
        x_q_ref, x_kv_ref = args[:2]
        mask_ref = None
        rest = args[2:]
    (ln1_g_ref, ln1_b_ref,
     w_q_ref, b_q_ref, w_kv_ref, b_kv_ref,
     w_o_ref, b_o_ref,
     ln2_g_ref, ln2_b_ref,
     w_fc_ref, b_fc_ref, w_proj_ref, b_proj_ref,
     out_ref,
     k_cache, v_cache, m_scr, l_scr, acc_scr) = rest

    TQ, E = x_q_ref.shape            # query tile
    H = n_heads
    hd = E // H
    n_kv, _, TKV, _ = k_cache.shape  # KV tiling of the cache
    mm_dtype = w_q_ref.dtype         # bf16 matmul operands, f32 accumulate
    qi = pl.program_id(1)

    # ---- K/V path: LayerNorm + fused K/V projection, ONCE per batch element.
    # Cached head-major in persistent VMEM scratch; legal because the q-tile
    # grid axis is 'arbitrary' (sequential per batch element on one core).
    @pl.when(qi == 0)
    def _build_kv_cache():
        x_kv = x_kv_ref[...].astype(jnp.float32)                     # (T, E)
        h_kv = _layernorm(x_kv, ln1_g_ref[...], ln1_b_ref[...])
        kv = jnp.dot(h_kv.astype(mm_dtype), w_kv_ref[...],
                     preferred_element_type=jnp.float32) + b_kv_ref[...]  # (T, 2E)
        for h in range(H):           # static unroll, once per batch element
            k_cache[:, h] = kv[:, h * hd:(h + 1) * hd] \
                .reshape(n_kv, TKV, hd).astype(mm_dtype)
            v_cache[:, h] = kv[:, E + h * hd:E + (h + 1) * hd] \
                .reshape(n_kv, TKV, hd).astype(mm_dtype)

    # ---- per-query-tile work ----
    x_q = x_q_ref[...].astype(jnp.float32)                           # (TQ, E)
    h_q = _layernorm(x_q, ln1_g_ref[...], ln1_b_ref[...])
    # 1/sqrt(hd) is pre-folded into w_q / b_q by prepare_block_params().
    q = jnp.dot(h_q.astype(mm_dtype), w_q_ref[...],
                preferred_element_type=jnp.float32) + b_q_ref[...]   # (TQ, E)
    q_hm = jnp.stack([q[:, h * hd:(h + 1) * hd] for h in range(H)],
                     axis=0).astype(mm_dtype)                        # (H, TQ, hd)

    # ---- flash-style online softmax over KV tiles (scores never full-T) ----
    m_scr[...] = jnp.full_like(m_scr, -jnp.inf)
    l_scr[...] = jnp.zeros_like(l_scr)
    acc_scr[...] = jnp.zeros_like(acc_scr)

    q_start = qi * TQ
    if causal and not has_mask:
        # causal key-range restriction: keys beyond (qi+1)*TQ are never needed
        n_steps = qi + 1
    else:
        n_steps = n_kv

    @pl.loop(0, n_steps)
    def _kv_step(j):
        k_t = k_cache[j]             # (H, TKV, hd)
        v_t = v_cache[j]
        s = jnp.einsum('hqd,hkd->hqk', q_hm, k_t,
                       preferred_element_type=jnp.float32)           # (H, TQ, TKV)
        if causal:
            row = jax.lax.broadcasted_iota(jnp.int32, (1, TQ, TKV), 1) + q_start
            col = jax.lax.broadcasted_iota(jnp.int32, (1, TQ, TKV), 2) + j * TKV
            s = jnp.where(row >= col, s, -jnp.inf)
        if has_mask:
            s = s + mask_ref[...][None, :, :]   # additive (TQ, T); TKV == T here
        m_prev = m_scr[...]
        m_new = jnp.maximum(m_prev, jnp.max(s, axis=-1, keepdims=True))
        alpha = jnp.exp(m_prev - m_new)
        p = jnp.exp(s - m_new)
        l_scr[...] = alpha * l_scr[...] + jnp.sum(p, axis=-1, keepdims=True)
        acc_scr[...] = alpha * acc_scr[...] + jnp.einsum(
            'hqk,hkd->hqd', p.astype(mm_dtype), v_t,
            preferred_element_type=jnp.float32)
        m_scr[...] = m_new

    o = acc_scr[...] * pl.reciprocal(l_scr[...], approx=True)        # (H, TQ, hd)
    o_cat = jnp.concatenate([o[h] for h in range(H)], axis=-1)       # (TQ, E)
    attn = jnp.dot(o_cat.astype(mm_dtype), w_o_ref[...],
                   preferred_element_type=jnp.float32) + b_o_ref[...]

    x1 = x_q + attn                                                  # residual 1

    # ---- ln_2 + MLP (exact GELU); MLP dropout = identity ----
    h2 = _layernorm(x1, ln2_g_ref[...], ln2_b_ref[...])
    fc = _gelu_exact(jnp.dot(h2.astype(mm_dtype), w_fc_ref[...],
                             preferred_element_type=jnp.float32) + b_fc_ref[...])
    proj = jnp.dot(fc.astype(mm_dtype), w_proj_ref[...],
                   preferred_element_type=jnp.float32) + b_proj_ref[...]

    out_ref[...] = (x1 + proj).astype(out_ref.dtype)                 # residual 2


# ---------------------------------------------------------------------------
# one-time parameter preprocessing (hoisted out of the forward path)
# ---------------------------------------------------------------------------
def prepare_block_params(params, n_heads, mm_dtype=jnp.bfloat16):
    E = params['w_o'].shape[0]
    assert E % n_heads == 0
    hd = E // n_heads
    scale = 1.0 / math.sqrt(hd)
    f32 = jnp.float32
    w_qkv = params['w_qkv']                       # (3E, E), PyTorch (out, in)
    b_qkv = params['b_qkv'].reshape(3 * E)
    return {
        'ln1_g': params['ln1_g'].reshape(1, E).astype(f32),
        'ln1_b': params['ln1_b'].reshape(1, E).astype(f32),
        'w_q': (w_qkv[:E] * scale).T.astype(mm_dtype),               # (E, E)
        'b_q': (b_qkv[:E] * scale).reshape(1, E).astype(f32),
        # fused K|V projection -> one (E, 2E) matmul, one bias pass
        'w_kv': jnp.concatenate([w_qkv[E:2 * E].T, w_qkv[2 * E:].T],
                                axis=1).astype(mm_dtype),            # (E, 2E)
        'b_kv': b_qkv[E:].reshape(1, 2 * E).astype(f32),
        'w_o': params['w_o'].T.astype(mm_dtype),                     # (E, E)
        'b_o': params['b_o'].reshape(1, E).astype(f32),
        'ln2_g': params['ln2_g'].reshape(1, E).astype(f32),
        'ln2_b': params['ln2_b'].reshape(1, E).astype(f32),
        'w_fc': params['w_fc'].T.astype(mm_dtype),                   # (E, 4E)
        'b_fc': params['b_fc'].reshape(1, 4 * E).astype(f32),
        'w_proj': params['w_proj'].T.astype(mm_dtype),               # (4E, E)
        'b_proj': params['b_proj'].reshape(1, E).astype(f32),
    }


# ---------------------------------------------------------------------------
# wrapper
# ---------------------------------------------------------------------------
def transformer_block(x, prep, n_heads, is_causal=True, attn_mask=None,
                      q_tile=256,                 # 256 for v6e/v7x; 128 on v5e
                      activation_dtype=None,      # v5e: jnp.bfloat16 to halve x DMA
                      out_dtype=None,
                      single_buffer_weights=True,
                      vmem_limit_bytes=48 * 1024 * 1024):  # v7x headroom; raise on v5e/v6e
    B, T, E = x.shape
    assert E % n_heads == 0
    hd = E // n_heads
    orig_dtype = x.dtype
    out_dtype = orig_dtype if out_dtype is None else out_dtype
    if activation_dtype is not None:
        x = x.astype(activation_dtype)

    # query tile: q_tile rows when it divides T, else the full T
    TQ = q_tile if (T % q_tile == 0) else T
    n_q = T // TQ

    causal = bool(is_causal)
    has_mask = attn_mask is not None
    # KV tiling: TQ-wide tiles for the flash loop; a single full-T tile on the
    # additive-mask path (avoids dynamic lane-slicing of the (TQ, T) mask slab).
    TKV = T if has_mask else TQ
    n_kv = T // TKV
    mm_dtype = prep['w_q'].dtype

    if has_mask:
        if attn_mask.dtype == jnp.bool_:
            mask = jnp.where(attn_mask, -jnp.inf, 0.0).astype(jnp.float32)
        else:
            mask = attn_mask.astype(jnp.float32)
        mask = mask.reshape(T, T)
        # TODO(synk): 3-D per-batch / per-head PyTorch masks are not supported.

    # ---- BlockSpecs ----
    def const_spec(a):
        nd = a.ndim
        index_map = lambda b, qi, _n=nd: (0,) * _n
        if single_buffer_weights:
            try:
                # grid-invariant weights: single-buffer (halves resident VMEM)
                return pl.BlockSpec(a.shape, index_map,
                                    pipeline_mode=pl.Buffered(1))
            except Exception:
                pass   # older jax without pipeline_mode: fall back to default
        return pl.BlockSpec(a.shape, index_map)

    x_q_spec = pl.BlockSpec((None, TQ, E), lambda b, qi: (b, qi, 0))
    x_kv_spec = pl.BlockSpec((None, T, E), lambda b, qi: (b, 0, 0))
    out_spec = pl.BlockSpec((None, TQ, E), lambda b, qi: (b, qi, 0))

    operands = [x, x]
    in_specs = [x_q_spec, x_kv_spec]
    if has_mask:
        operands.append(mask)
        in_specs.append(pl.BlockSpec((TQ, T), lambda b, qi: (qi, 0)))

    weight_order = ['ln1_g', 'ln1_b', 'w_q', 'b_q', 'w_kv', 'b_kv', 'w_o', 'b_o',
                    'ln2_g', 'ln2_b', 'w_fc', 'b_fc', 'w_proj', 'b_proj']
    weights = [prep[k] for k in weight_order]
    operands += weights
    in_specs += [const_spec(a) for a in weights]

    kernel = functools.partial(_transformer_block_kernel, n_heads, causal, has_mask)

    return pl.pallas_call(
        kernel,
        out_shape=jax.ShapeDtypeStruct((B, T, E), out_dtype),
        grid=(B, n_q),
        in_specs=in_specs,
        out_specs=out_spec,
        scratch_shapes=[
            pltpu.VMEM((n_kv, n_heads, TKV, hd), mm_dtype),   # K cache (head-major)
            pltpu.VMEM((n_kv, n_heads, TKV, hd), mm_dtype),   # V cache (head-major)
            pltpu.VMEM((n_heads, TQ, 1), jnp.float32),        # online-softmax m
            pltpu.VMEM((n_heads, TQ, 1), jnp.float32),        # online-softmax l
            pltpu.VMEM((n_heads, TQ, hd), jnp.float32),       # output accumulator
        ],
        compiler_params=pltpu.CompilerParams(
            # batch axis parallel (megacore split on v7x); q-tile axis must be
            # 'arbitrary' so the per-batch K/V VMEM cache is legal.
            dimension_semantics=("parallel", "arbitrary"),
            vmem_limit_bytes=vmem_limit_bytes,
        ),
    )(*operands)


# ---------------------------------------------------------------------------
# pure-JAX f32 reference mirroring the PyTorch block
# ---------------------------------------------------------------------------
def transformer_block_ref(x, params, n_heads, mask):
    B, T, E = x.shape
    hd = E // n_heads
    h = _layernorm(x, params['ln1_g'], params['ln1_b'])
    qkv = h @ params['w_qkv'].T + params['b_qkv']
    q, k, v = qkv[..., :E], qkv[..., E:2 * E], qkv[..., 2 * E:]
    q = q.reshape(B, T, n_heads, hd).transpose(0, 2, 1, 3)
    k = k.reshape(B, T, n_heads, hd).transpose(0, 2, 1, 3)
    v = v.reshape(B, T, n_heads, hd).transpose(0, 2, 1, 3)
    s = jnp.einsum('bhtd,bhsd->bhts', q, k) / math.sqrt(hd) + mask[None, None]
    p = jax.nn.softmax(s, axis=-1)
    o = jnp.einsum('bhts,bhsd->bhtd', p, v).transpose(0, 2, 1, 3).reshape(B, T, E)
    attn = o @ params['w_o'].T + params['b_o']
    x1 = x + attn
    h2 = _layernorm(x1, params['ln2_g'], params['ln2_b'])
    fc = _gelu_exact(h2 @ params['w_fc'].T + params['b_fc'])
    proj = fc @ params['w_proj'].T + params['b_proj']
    return x1 + proj


def init_params(key, n_embeddings):
    E = n_embeddings
    ks = jax.random.split(key, 8)
    std = 0.02
    return {
        'ln1_g': jnp.ones((1, E), jnp.float32),
        'ln1_b': jnp.zeros((1, E), jnp.float32),
        'w_qkv': std * jax.random.normal(ks[0], (3 * E, E), jnp.float32),
        'b_qkv': std * jax.random.normal(ks[1], (1, 3 * E), jnp.float32),
        'w_o':   std * jax.random.normal(ks[2], (E, E), jnp.float32),
        'b_o':   std * jax.random.normal(ks[3], (1, E), jnp.float32),
        'ln2_g': jnp.ones((1, E), jnp.float32),
        'ln2_b': jnp.zeros((1, E), jnp.float32),
        'w_fc':   std * jax.random.normal(ks[4], (4 * E, E), jnp.float32),
        'b_fc':   std * jax.random.normal(ks[5], (1, 4 * E), jnp.float32),
        'w_proj': std * jax.random.normal(ks[6], (E, 4 * E), jnp.float32),
        'b_proj': std * jax.random.normal(ks[7], (1, E), jnp.float32),
    }


if __name__ == "__main__":
    # small shapes; q_tile=8 gives 2 query tiles so the KV cache reuse across
    # q-tiles and the dynamic causal trip count (qi+1) are actually exercised.
    B, T, E, H = 2, 16, 32, 4

    key = jax.random.PRNGKey(0)
    kx, kp = jax.random.split(key)
    x = jax.random.normal(kx, (B, T, E), jnp.float32)
    params = init_params(kp, E)
    prep = prepare_block_params(params, n_heads=H)   # one-time, out of forward path

    # --- causal (flash-loop) path ---
    out = transformer_block(x, prep, n_heads=H, is_causal=True,
                            attn_mask=None, q_tile=8)
    out = jax.block_until_ready(out)

    causal_mask = jnp.where(jnp.tril(jnp.ones((T, T), dtype=bool)), 0.0,
                            -jnp.inf).astype(jnp.float32)
    ref = transformer_block_ref(x, params, H, causal_mask)
    assert out.shape == (B, T, E)
    assert bool(jnp.all(jnp.isfinite(out)))
    err = float(jnp.max(jnp.abs(out - ref)))
    assert bool(jnp.allclose(out, ref, atol=2e-2, rtol=2e-2)), f"causal max err {err}"

    # --- additive-mask path (same causal mask supplied explicitly) ---
    out_m = transformer_block(x, prep, n_heads=H, is_causal=False,
                              attn_mask=causal_mask, q_tile=8)
    out_m = jax.block_until_ready(out_m)
    err_m = float(jnp.max(jnp.abs(out_m - ref)))
    assert bool(jnp.allclose(out_m, ref, atol=2e-2, rtol=2e-2)), f"mask max err {err_m}"

    print("KERNEL_OK")
</pallas_src>

<mosaic_0001>
module attributes {stable_mosaic.version = 11 : i64} {
  func.func @_transformer_block_kernel(%arg0: i32, %arg1: i32, %arg2: memref<1x8x32xf32, #tpu.memory_space<vmem>>, %arg3: memref<1x16x32xf32, #tpu.memory_space<vmem>>, %arg4: memref<1x32xf32, #tpu.memory_space<vmem>>, %arg5: memref<1x32xf32, #tpu.memory_space<vmem>>, %arg6: memref<32x32xbf16, #tpu.memory_space<vmem>>, %arg7: memref<1x32xf32, #tpu.memory_space<vmem>>, %arg8: memref<32x64xbf16, #tpu.memory_space<vmem>>, %arg9: memref<1x64xf32, #tpu.memory_space<vmem>>, %arg10: memref<32x32xbf16, #tpu.memory_space<vmem>>, %arg11: memref<1x32xf32, #tpu.memory_space<vmem>>, %arg12: memref<1x32xf32, #tpu.memory_space<vmem>>, %arg13: memref<1x32xf32, #tpu.memory_space<vmem>>, %arg14: memref<32x128xbf16, #tpu.memory_space<vmem>>, %arg15: memref<1x128xf32, #tpu.memory_space<vmem>>, %arg16: memref<128x32xbf16, #tpu.memory_space<vmem>>, %arg17: memref<1x32xf32, #tpu.memory_space<vmem>>, %arg18: memref<1x8x32xf32, #tpu.memory_space<vmem>>, %arg19: memref<2x4x8x8xbf16, #tpu.memory_space<vmem>>, %arg20: memref<2x4x8x8xbf16, #tpu.memory_space<vmem>>, %arg21: memref<4x8x1xf32, #tpu.memory_space<vmem>>, %arg22: memref<4x8x1xf32, #tpu.memory_space<vmem>>, %arg23: memref<4x8x8xf32, #tpu.memory_space<vmem>>) attributes {dimension_semantics = [#tpu.dimension_semantics<parallel>, #tpu.dimension_semantics<arbitrary>], iteration_bounds = array<i64: 2, 2>, scalar_prefetch = 0 : i64, scratch_operands = 5 : i64, tpu.core_type = #tpu.core_type<tc>, window_params = [{transform_indices = @transform_0, window_bounds = array<i64: 1, 8, 32>}, {transform_indices = @transform_1, window_bounds = array<i64: 1, 16, 32>}, {pipeline_mode = #tpu.pipeline_mode<synchronous>, transform_indices = @transform_2, window_bounds = array<i64: 1, 32>}, {pipeline_mode = #tpu.pipeline_mode<synchronous>, transform_indices = @transform_3, window_bounds = array<i64: 1, 32>}, {pipeline_mode = #tpu.pipeline_mode<synchronous>, transform_indices = @transform_4, window_bounds = array<i64: 32, 32>}, {pipeline_mode = #tpu.pipeline_mode<synchronous>, transform_indices = @transform_5, window_bounds = array<i64: 1, 32>}, {pipeline_mode = #tpu.pipeline_mode<synchronous>, transform_indices = @transform_6, window_bounds = array<i64: 32, 64>}, {pipeline_mode = #tpu.pipeline_mode<synchronous>, transform_indices = @transform_7, window_bounds = array<i64: 1, 64>}, {pipeline_mode = #tpu.pipeline_mode<synchronous>, transform_indices = @transform_8, window_bounds = array<i64: 32, 32>}, {pipeline_mode = #tpu.pipeline_mode<synchronous>, transform_indices = @transform_9, window_bounds = array<i64: 1, 32>}, {pipeline_mode = #tpu.pipeline_mode<synchronous>, transform_indices = @transform_10, window_bounds = array<i64: 1, 32>}, {pipeline_mode = #tpu.pipeline_mode<synchronous>, transform_indices = @transform_11, window_bounds = array<i64: 1, 32>}, {pipeline_mode = #tpu.pipeline_mode<synchronous>, transform_indices = @transform_12, window_bounds = array<i64: 32, 128>}, {pipeline_mode = #tpu.pipeline_mode<synchronous>, transform_indices = @transform_13, window_bounds = array<i64: 1, 128>}, {pipeline_mode = #tpu.pipeline_mode<synchronous>, transform_indices = @transform_14, window_bounds = array<i64: 128, 32>}, {pipeline_mode = #tpu.pipeline_mode<synchronous>, transform_indices = @transform_15, window_bounds = array<i64: 1, 32>}, {transform_indices = @transform_16, window_bounds = array<i64: 1, 8, 32>}]} {
    %c0_i32 = arith.constant 0 : i32
    %0 = arith.cmpi eq, %arg1, %c0_i32 : i32
    %1 = arith.extui %0 : i1 to i32
    %c0_i32_0 = arith.constant 0 : i32
    %2 = arith.cmpi ne, %1, %c0_i32_0 : i32
    scf.if %2 {
      %c0_72 = arith.constant 0 : index
      %c0_73 = arith.constant 0 : index
      %c0_74 = arith.constant 0 : index
      %128 = vector.load %arg3[%c0_72, %c0_73, %c0_74] : memref<1x16x32xf32, #tpu.memory_space<vmem>>, vector<1x16x32xf32>
      %129 = vector.shape_cast %128 : vector<1x16x32xf32> to vector<16x32xf32>
      %c0_75 = arith.constant 0 : index
      %c0_76 = arith.constant 0 : index
      %130 = vector.load %arg4[%c0_75, %c0_76] : memref<1x32xf32, #tpu.memory_space<vmem>>, vector<1x32xf32>
      %c0_77 = arith.constant 0 : index
      %c0_78 = arith.constant 0 : index
      %131 = vector.load %arg5[%c0_77, %c0_78] : memref<1x32xf32, #tpu.memory_space<vmem>>, vector<1x32xf32>
      %cst_79 = arith.constant dense<0.000000e+00> : vector<16xf32>
      %132 = vector.multi_reduction <add>, %129, %cst_79 [1] : vector<16x32xf32> to vector<16xf32>
      %133 = vector.shape_cast %132 : vector<16xf32> to vector<16x1xf32>
      %cst_80 = arith.constant 3.200000e+01 : f32
      %134 = vector.broadcast %cst_80 : f32 to vector<16x1xf32>
      %135 = arith.divf %133, %134 : vector<16x1xf32>
      %136 = vector.broadcast %135 : vector<16x1xf32> to vector<16x32xf32>
      %137 = arith.subf %129, %136 : vector<16x32xf32>
      %138 = arith.mulf %137, %137 : vector<16x32xf32>
      %cst_81 = arith.constant dense<0.000000e+00> : vector<16xf32>
      %139 = vector.multi_reduction <add>, %138, %cst_81 [1] : vector<16x32xf32> to vector<16xf32>
      %140 = vector.shape_cast %139 : vector<16xf32> to vector<16x1xf32>
      %cst_82 = arith.constant 3.200000e+01 : f32
      %141 = vector.broadcast %cst_82 : f32 to vector<16x1xf32>
      %142 = arith.divf %140, %141 : vector<16x1xf32>
      %143 = vector.broadcast %135 : vector<16x1xf32> to vector<16x32xf32>
      %144 = arith.subf %129, %143 : vector<16x32xf32>
      %cst_83 = arith.constant 9.99999974E-6 : f32
      %145 = vector.broadcast %cst_83 : f32 to vector<16x1xf32>
      %146 = arith.addf %142, %145 : vector<16x1xf32>
      %147 = math.rsqrt %146 : vector<16x1xf32>
      %148 = vector.broadcast %147 : vector<16x1xf32> to vector<16x32xf32>
      %149 = arith.mulf %144, %148 : vector<16x32xf32>
      %150 = vector.broadcast %130 : vector<1x32xf32> to vector<16x32xf32>
      %151 = arith.mulf %149, %150 : vector<16x32xf32>
      %152 = vector.broadcast %131 : vector<1x32xf32> to vector<16x32xf32>
      %153 = arith.addf %151, %152 : vector<16x32xf32>
      %154 = arith.truncf %153 : vector<16x32xf32> to vector<16x32xbf16>
      %c0_84 = arith.constant 0 : index
      %c0_85 = arith.constant 0 : index
      %155 = vector.load %arg8[%c0_84, %c0_85] : memref<32x64xbf16, #tpu.memory_space<vmem>>, vector<32x64xbf16>
      %cst_86 = arith.constant dense<0.000000e+00> : vector<16x64xf32>
      %156 = tpu.matmul %154, %155, %cst_86 {dimension_numbers = #tpu.dot_dimension_numbers<[1], [0], [0], [1], [0, 0, 1, 1], [], []>} : vector<16x32xbf16>, vector<32x64xbf16>, vector<16x64xf32> -> vector<16x64xf32>
      %c0_87 = arith.constant 0 : index
      %c0_88 = arith.constant 0 : index
      %157 = vector.load %arg9[%c0_87, %c0_88] : memref<1x64xf32, #tpu.memory_space<vmem>>, vector<1x64xf32>
      %158 = vector.broadcast %157 : vector<1x64xf32> to vector<16x64xf32>
      %159 = arith.addf %156, %158 : vector<16x64xf32>
      %160 = vector.extract_strided_slice %159 {offsets = [0, 0], sizes = [16, 8], strides = [1, 1]} : vector<16x64xf32> to vector<16x8xf32>
      %161 = vector.shape_cast %160 : vector<16x8xf32> to vector<2x8x8xf32>
      %162 = arith.truncf %161 : vector<2x8x8xf32> to vector<2x8x8xbf16>
      %c0_89 = arith.constant 0 : index
      %c0_90 = arith.constant 0 : index
      %c0_91 = arith.constant 0 : index
      %c0_92 = arith.constant 0 : index
      %163 = vector.load %arg19[%c0_89, %c0_90, %c0_91, %c0_92] : memref<2x4x8x8xbf16, #tpu.memory_space<vmem>>, vector<2x1x8x8xbf16>
      %164 = vector.shape_cast %163 : vector<2x1x8x8xbf16> to vector<2x8x8xbf16>
      %165 = vector.shape_cast %162 : vector<2x8x8xbf16> to vector<2x1x8x8xbf16>
      tpu.vector_store %arg19[%c0_89, %c0_90, %c0_91, %c0_92], %165 {strides = array<i32>} : memref<2x4x8x8xbf16, #tpu.memory_space<vmem>>, vector<2x1x8x8xbf16>,
      %166 = vector.extract_strided_slice %159 {offsets = [0, 32], sizes = [16, 8], strides = [1, 1]} : vector<16x64xf32> to vector<16x8xf32>
      %167 = vector.shape_cast %166 : vector<16x8xf32> to vector<2x8x8xf32>
      %168 = arith.truncf %167 : vector<2x8x8xf32> to vector<2x8x8xbf16>
      %c0_93 = arith.constant 0 : index
      %c0_94 = arith.constant 0 : index
      %c0_95 = arith.constant 0 : index
      %c0_96 = arith.constant 0 : index
      %169 = vector.load %arg20[%c0_93, %c0_94, %c0_95, %c0_96] : memref<2x4x8x8xbf16, #tpu.memory_space<vmem>>, vector<2x1x8x8xbf16>
      %170 = vector.shape_cast %169 : vector<2x1x8x8xbf16> to vector<2x8x8xbf16>
      %171 = vector.shape_cast %168 : vector<2x8x8xbf16> to vector<2x1x8x8xbf16>
      tpu.vector_store %arg20[%c0_93, %c0_94, %c0_95, %c0_96], %171 {strides = array<i32>} : memref<2x4x8x8xbf16, #tpu.memory_space<vmem>>, vector<2x1x8x8xbf16>,
      %172 = vector.extract_strided_slice %159 {offsets = [0, 8], sizes = [16, 8], strides = [1, 1]} : vector<16x64xf32> to vector<16x8xf32>
      %173 = vector.shape_cast %172 : vector<16x8xf32> to vector<2x8x8xf32>
      %174 = arith.truncf %173 : vector<2x8x8xf32> to vector<2x8x8xbf16>
      %c0_97 = arith.constant 0 : index
      %c1 = arith.constant 1 : index
      %c0_98 = arith.constant 0 : index
      %c0_99 = arith.constant 0 : index
      %175 = vector.load %arg19[%c0_97, %c1, %c0_98, %c0_99] : memref<2x4x8x8xbf16, #tpu.memory_space<vmem>>, vector<2x1x8x8xbf16>
      %176 = vector.shape_cast %175 : vector<2x1x8x8xbf16> to vector<2x8x8xbf16>
      %177 = vector.shape_cast %174 : vector<2x8x8xbf16> to vector<2x1x8x8xbf16>
      tpu.vector_store %arg19[%c0_97, %c1, %c0_98, %c0_99], %177 {strides = array<i32>} : memref<2x4x8x8xbf16, #tpu.memory_space<vmem>>, vector<2x1x8x8xbf16>,
      %178 = vector.extract_strided_slice %159 {offsets = [0, 40], sizes = [16, 8], strides = [1, 1]} : vector<16x64xf32> to vector<16x8xf32>
      %179 = vector.shape_cast %178 : vector<16x8xf32> to vector<2x8x8xf32>
      %180 = arith.truncf %179 : vector<2x8x8xf32> to vector<2x8x8xbf16>
      %c0_100 = arith.constant 0 : index
      %c1_101 = arith.constant 1 : index
      %c0_102 = arith.constant 0 : index
      %c0_103 = arith.constant 0 : index
      %181 = vector.load %arg20[%c0_100, %c1_101, %c0_102, %c0_103] : memref<2x4x8x8xbf16, #tpu.memory_space<vmem>>, vector<2x1x8x8xbf16>
      %182 = vector.shape_cast %181 : vector<2x1x8x8xbf16> to vector<2x8x8xbf16>
      %183 = vector.shape_cast %180 : vector<2x8x8xbf16> to vector<2x1x8x8xbf16>
      tpu.vector_store %arg20[%c0_100, %c1_101, %c0_102, %c0_103], %183 {strides = array<i32>} : memref<2x4x8x8xbf16, #tpu.memory_space<vmem>>, vector<2x1x8x8xbf16>,
      %184 = vector.extract_strided_slice %159 {offsets = [0, 16], sizes = [16, 8], strides = [1, 1]} : vector<16x64xf32> to vector<16x8xf32>
      %185 = vector.shape_cast %184 : vector<16x8xf32> to vector<2x8x8xf32>
      %186 = arith.truncf %185 : vector<2x8x8xf32> to vector<2x8x8xbf16>
      %c0_104 = arith.constant 0 : index
      %c2 = arith.constant 2 : index
      %c0_105 = arith.constant 0 : index
      %c0_106 = arith.constant 0 : index
      %187 = vector.load %arg19[%c0_104, %c2, %c0_105, %c0_106] : memref<2x4x8x8xbf16, #tpu.memory_space<vmem>>, vector<2x1x8x8xbf16>
      %188 = vector.shape_cast %187 : vector<2x1x8x8xbf16> to vector<2x8x8xbf16>
      %189 = vector.shape_cast %186 : vector<2x8x8xbf16> to vector<2x1x8x8xbf16>
      tpu.vector_store %arg19[%c0_104, %c2, %c0_105, %c0_106], %189 {strides = array<i32>} : memref<2x4x8x8xbf16, #tpu.memory_space<vmem>>, vector<2x1x8x8xbf16>,
      %190 = vector.extract_strided_slice %159 {offsets = [0, 48], sizes = [16, 8], strides = [1, 1]} : vector<16x64xf32> to vector<16x8xf32>
      %191 = vector.shape_cast %190 : vector<16x8xf32> to vector<2x8x8xf32>
      %192 = arith.truncf %191 : vector<2x8x8xf32> to vector<2x8x8xbf16>
      %c0_107 = arith.constant 0 : index
      %c2_108 = arith.constant 2 : index
      %c0_109 = arith.constant 0 : index
      %c0_110 = arith.constant 0 : index
      %193 = vector.load %arg20[%c0_107, %c2_108, %c0_109, %c0_110] : memref<2x4x8x8xbf16, #tpu.memory_space<vmem>>, vector<2x1x8x8xbf16>
      %194 = vector.shape_cast %193 : vector<2x1x8x8xbf16> to vector<2x8x8xbf16>
      %195 = vector.shape_cast %192 : vector<2x8x8xbf16> to vector<2x1x8x8xbf16>
      tpu.vector_store %arg20[%c0_107, %c2_108, %c0_109, %c0_110], %195 {strides = array<i32>} : memref<2x4x8x8xbf16, #tpu.memory_space<vmem>>, vector<2x1x8x8xbf16>,
      %196 = vector.extract_strided_slice %159 {offsets = [0, 24], sizes = [16, 8], strides = [1, 1]} : vector<16x64xf32> to vector<16x8xf32>
      %197 = vector.shape_cast %196 : vector<16x8xf32> to vector<2x8x8xf32>
      %198 = arith.truncf %197 : vector<2x8x8xf32> to vector<2x8x8xbf16>
      %c0_111 = arith.constant 0 : index
      %c3 = arith.constant 3 : index
      %c0_112 = arith.constant 0 : index
      %c0_113 = arith.constant 0 : index
      %199 = vector.load %arg19[%c0_111, %c3, %c0_112, %c0_113] : memref<2x4x8x8xbf16, #tpu.memory_space<vmem>>, vector<2x1x8x8xbf16>
      %200 = vector.shape_cast %199 : vector<2x1x8x8xbf16> to vector<2x8x8xbf16>
      %201 = vector.shape_cast %198 : vector<2x8x8xbf16> to vector<2x1x8x8xbf16>
      tpu.vector_store %arg19[%c0_111, %c3, %c0_112, %c0_113], %201 {strides = array<i32>} : memref<2x4x8x8xbf16, #tpu.memory_space<vmem>>, vector<2x1x8x8xbf16>,
      %202 = vector.extract_strided_slice %159 {offsets = [0, 56], sizes = [16, 8], strides = [1, 1]} : vector<16x64xf32> to vector<16x8xf32>
      %203 = vector.shape_cast %202 : vector<16x8xf32> to vector<2x8x8xf32>
      %204 = arith.truncf %203 : vector<2x8x8xf32> to vector<2x8x8xbf16>
      %c0_114 = arith.constant 0 : index
      %c3_115 = arith.constant 3 : index
      %c0_116 = arith.constant 0 : index
      %c0_117 = arith.constant 0 : index
      %205 = vector.load %arg20[%c0_114, %c3_115, %c0_116, %c0_117] : memref<2x4x8x8xbf16, #tpu.memory_space<vmem>>, vector<2x1x8x8xbf16>
      %206 = vector.shape_cast %205 : vector<2x1x8x8xbf16> to vector<2x8x8xbf16>
      %207 = vector.shape_cast %204 : vector<2x8x8xbf16> to vector<2x1x8x8xbf16>
      tpu.vector_store %arg20[%c0_114, %c3_115, %c0_116, %c0_117], %207 {strides = array<i32>} : memref<2x4x8x8xbf16, #tpu.memory_space<vmem>>, vector<2x1x8x8xbf16>,
    } else {
    }
    %c0 = arith.constant 0 : index
    %c0_1 = arith.constant 0 : index
    %c0_2 = arith.constant 0 : index
    %3 = vector.load %arg2[%c0, %c0_1, %c0_2] : memref<1x8x32xf32, #tpu.memory_space<vmem>>, vector<1x8x32xf32>
    %4 = vector.shape_cast %3 : vector<1x8x32xf32> to vector<8x32xf32>
    %c0_3 = arith.constant 0 : index
    %c0_4 = arith.constant 0 : index
    %5 = vector.load %arg4[%c0_3, %c0_4] : memref<1x32xf32, #tpu.memory_space<vmem>>, vector<1x32xf32>
    %c0_5 = arith.constant 0 : index
    %c0_6 = arith.constant 0 : index
    %6 = vector.load %arg5[%c0_5, %c0_6] : memref<1x32xf32, #tpu.memory_space<vmem>>, vector<1x32xf32>
    %cst = arith.constant dense<0.000000e+00> : vector<8xf32>
    %7 = vector.multi_reduction <add>, %4, %cst [1] : vector<8x32xf32> to vector<8xf32>
    %8 = vector.shape_cast %7 : vector<8xf32> to vector<8x1xf32>
    %cst_7 = arith.constant 3.200000e+01 : f32
    %9 = vector.broadcast %cst_7 : f32 to vector<8x1xf32>
    %10 = arith.divf %8, %9 : vector<8x1xf32>
    %11 = vector.broadcast %10 : vector<8x1xf32> to vector<8x32xf32>
    %12 = arith.subf %4, %11 : vector<8x32xf32>
    %13 = arith.mulf %12, %12 : vector<8x32xf32>
    %cst_8 = arith.constant dense<0.000000e+00> : vector<8xf32>
    %14 = vector.multi_reduction <add>, %13, %cst_8 [1] : vector<8x32xf32> to vector<8xf32>
    %15 = vector.shape_cast %14 : vector<8xf32> to vector<8x1xf32>
    %cst_9 = arith.constant 3.200000e+01 : f32
    %16 = vector.broadcast %cst_9 : f32 to vector<8x1xf32>
    %17 = arith.divf %15, %16 : vector<8x1xf32>
    %18 = vector.broadcast %10 : vector<8x1xf32> to vector<8x32xf32>
    %19 = arith.subf %4, %18 : vector<8x32xf32>
    %cst_10 = arith.constant 9.99999974E-6 : f32
    %20 = vector.broadcast %cst_10 : f32 to vector<8x1xf32>
    %21 = arith.addf %17, %20 : vector<8x1xf32>
    %22 = math.rsqrt %21 : vector<8x1xf32>
    %23 = vector.broadcast %22 : vector<8x1xf32> to vector<8x32xf32>
    %24 = arith.mulf %19, %23 : vector<8x32xf32>
    %25 = vector.broadcast %5 : vector<1x32xf32> to vector<8x32xf32>
    %26 = arith.mulf %24, %25 : vector<8x32xf32>
    %27 = vector.broadcast %6 : vector<1x32xf32> to vector<8x32xf32>
    %28 = arith.addf %26, %27 : vector<8x32xf32>
    %29 = arith.truncf %28 : vector<8x32xf32> to vector<8x32xbf16>
    %c0_11 = arith.constant 0 : index
    %c0_12 = arith.constant 0 : index
    %30 = vector.load %arg6[%c0_11, %c0_12] : memref<32x32xbf16, #tpu.memory_space<vmem>>, vector<32x32xbf16>
    %cst_13 = arith.constant dense<0.000000e+00> : vector<8x32xf32>
    %31 = tpu.matmul %29, %30, %cst_13 {dimension_numbers = #tpu.dot_dimension_numbers<[1], [0], [0], [1], [0, 0, 1, 1], [], []>} : vector<8x32xbf16>, vector<32x32xbf16>, vector<8x32xf32> -> vector<8x32xf32>
    %c0_14 = arith.constant 0 : index
    %c0_15 = arith.constant 0 : index
    %32 = vector.load %arg7[%c0_14, %c0_15] : memref<1x32xf32, #tpu.memory_space<vmem>>, vector<1x32xf32>
    %33 = vector.broadcast %32 : vector<1x32xf32> to vector<8x32xf32>
    %34 = arith.addf %31, %33 : vector<8x32xf32>
    %35 = vector.extract_strided_slice %34 {offsets = [0, 0], sizes = [8, 8], strides = [1, 1]} : vector<8x32xf32> to vector<8x8xf32>
    %36 = vector.extract_strided_slice %34 {offsets = [0, 8], sizes = [8, 8], strides = [1, 1]} : vector<8x32xf32> to vector<8x8xf32>
    %37 = vector.extract_strided_slice %34 {offsets = [0, 16], sizes = [8, 8], strides = [1, 1]} : vector<8x32xf32> to vector<8x8xf32>
    %38 = vector.extract_strided_slice %34 {offsets = [0, 24], sizes = [8, 8], strides = [1, 1]} : vector<8x32xf32> to vector<8x8xf32>
    %39 = vector.shape_cast %35 : vector<8x8xf32> to vector<1x8x8xf32>
    %40 = vector.shape_cast %36 : vector<8x8xf32> to vector<1x8x8xf32>
    %41 = vector.shape_cast %37 : vector<8x8xf32> to vector<1x8x8xf32>
    %42 = vector.shape_cast %38 : vector<8x8xf32> to vector<1x8x8xf32>
    %43 = tpu.concatenate %39, %40, %41, %42 in 0 : vector<1x8x8xf32>, vector<1x8x8xf32>, vector<1x8x8xf32>, vector<1x8x8xf32> -> vector<4x8x8xf32>
    %44 = arith.truncf %43 : vector<4x8x8xf32> to vector<4x8x8xbf16>
    %cst_16 = arith.constant 0xFF800000 : f32
    %45 = vector.broadcast %cst_16 : f32 to vector<4x8x1xf32>
    %c0_17 = arith.constant 0 : index
    %c0_18 = arith.constant 0 : index
    %c0_19 = arith.constant 0 : index
    %46 = vector.load %arg21[%c0_17, %c0_18, %c0_19] : memref<4x8x1xf32, #tpu.memory_space<vmem>>, vector<4x8x1xf32>
    tpu.vector_store %arg21[%c0_17, %c0_18, %c0_19], %45 {strides = array<i32>} : memref<4x8x1xf32, #tpu.memory_space<vmem>>, vector<4x8x1xf32>,
    %cst_20 = arith.constant 0.000000e+00 : f32
    %47 = vector.broadcast %cst_20 : f32 to vector<4x8x1xf32>
    %c0_21 = arith.constant 0 : index
    %c0_22 = arith.constant 0 : index
    %c0_23 = arith.constant 0 : index
    %48 = vector.load %arg22[%c0_21, %c0_22, %c0_23] : memref<4x8x1xf32, #tpu.memory_space<vmem>>, vector<4x8x1xf32>
    tpu.vector_store %arg22[%c0_21, %c0_22, %c0_23], %47 {strides = array<i32>} : memref<4x8x1xf32, #tpu.memory_space<vmem>>, vector<4x8x1xf32>,
    %cst_24 = arith.constant 0.000000e+00 : f32
    %49 = vector.broadcast %cst_24 : f32 to vector<4x8x8xf32>
    %c0_25 = arith.constant 0 : index
    %c0_26 = arith.constant 0 : index
    %c0_27 = arith.constant 0 : index
    %50 = vector.load %arg23[%c0_25, %c0_26, %c0_27] : memref<4x8x8xf32, #tpu.memory_space<vmem>>, vector<4x8x8xf32>
    tpu.vector_store %arg23[%c0_25, %c0_26, %c0_27], %49 {strides = array<i32>} : memref<4x8x8xf32, #tpu.memory_space<vmem>>, vector<4x8x8xf32>,
    %c8_i32 = arith.constant 8 : i32
    %51 = arith.muli %arg1, %c8_i32 : i32
    %c1_i32 = arith.constant 1 : i32
    %52 = arith.addi %arg1, %c1_i32 : i32
    %c0_i32_28 = arith.constant 0 : i32
    %53 = arith.subi %52, %c0_i32_28 : i32
    %c1_i32_29 = arith.constant 1 : i32
    %c1_i32_30 = arith.constant 1 : i32
    %54 = arith.subi %c1_i32_29, %c1_i32_30 : i32
    %55 = arith.addi %53, %54 : i32
    %c1_i32_31 = arith.constant 1 : i32
    %56 = arith.divsi %55, %c1_i32_31 : i32
    %c1_i32_32 = arith.constant 1 : i32
    %c0_i32_33 = arith.constant 0 : i32
    %c0_i32_34 = arith.constant 0 : i32
    %57 = arith.subi %56, %c0_i32_34 : i32
    %58 = arith.addi %c0_i32_34, %57 : i32
    %c1_i32_35 = arith.constant 1 : i32
    scf.for %arg24 = %c0_i32_34 to %58 step %c1_i32_35  : i32 {
      %128 = arith.muli %arg24, %c1_i32_32 : i32
      %129 = arith.addi %c0_i32_33, %128 : i32
      %130 = arith.index_cast %129 : i32 to index
      %c0_72 = arith.constant 0 : index
      %c0_73 = arith.constant 0 : index
      %c0_74 = arith.constant 0 : index
      %131 = vector.load %arg19[%130, %c0_72, %c0_73, %c0_74] : memref<2x4x8x8xbf16, #tpu.memory_space<vmem>>, vector<1x4x8x8xbf16>
      %132 = vector.shape_cast %131 : vector<1x4x8x8xbf16> to vector<4x8x8xbf16>
      %133 = arith.index_cast %129 : i32 to index
      %c0_75 = arith.constant 0 : index
      %c0_76 = arith.constant 0 : index
      %c0_77 = arith.constant 0 : index
      %134 = vector.load %arg20[%133, %c0_75, %c0_76, %c0_77] : memref<2x4x8x8xbf16, #tpu.memory_space<vmem>>, vector<1x4x8x8xbf16>
      %135 = vector.shape_cast %134 : vector<1x4x8x8xbf16> to vector<4x8x8xbf16>
      "tpu.trace_start"() <{level = 10 : i32, message = "hqd,hkd->hqk"}> : () -> ()
      %cst_78 = arith.constant dense<0.000000e+00> : vector<4x8x8xf32>
      %136 = tpu.matmul %44, %132, %cst_78 {dimension_numbers = #tpu.dot_dimension_numbers<[2], [2], [1], [1], [0, 0, 0, 1, 1, 1], [0], [0]>} : vector<4x8x8xbf16>, vector<4x8x8xbf16>, vector<4x8x8xf32> -> vector<4x8x8xf32>
      "tpu.trace_stop"() : () -> ()
      %137 = tpu.iota {dimensions = array<i32: 1>} : vector<1x8x8xi32>
      %138 = vector.broadcast %51 : i32 to vector<1x8x8xi32>
      %139 = arith.addi %137, %138 : vector<1x8x8xi32>
      %140 = tpu.iota {dimensions = array<i32: 2>} : vector<1x8x8xi32>
      %c8_i32_79 = arith.constant 8 : i32
      %141 = arith.muli %129, %c8_i32_79 : i32
      %142 = vector.broadcast %141 : i32 to vector<1x8x8xi32>
      %143 = arith.addi %140, %142 : vector<1x8x8xi32>
      %144 = arith.cmpi sge, %139, %143 : vector<1x8x8xi32>
      %cst_80 = arith.constant 0xFF800000 : f32
      %145 = vector.shape_cast %144 : vector<1x8x8xi1> to vector<1x8x8xi1>
      %146 = vector.broadcast %145 : vector<1x8x8xi1> to vector<4x8x8xi1>
      %147 = vector.broadcast %cst_80 : f32 to vector<4x8x8xf32>
      %148 = arith.select %146, %136, %147 : vector<4x8x8xi1>, vector<4x8x8xf32>
      %c0_81 = arith.constant 0 : index
      %c0_82 = arith.constant 0 : index
      %c0_83 = arith.constant 0 : index
      %149 = vector.load %arg21[%c0_81, %c0_82, %c0_83] : memref<4x8x1xf32, #tpu.memory_space<vmem>>, vector<4x8x1xf32>
      %cst_84 = arith.constant dense<0xFF800000> : vector<4x8xf32>
      %150 = vector.multi_reduction <maximumf>, %148, %cst_84 [2] : vector<4x8x8xf32> to vector<4x8xf32>
      %151 = vector.shape_cast %150 : vector<4x8xf32> to vector<4x8x1xf32>
      %152 = arith.maximumf %149, %151 : vector<4x8x1xf32>
      %153 = arith.subf %149, %152 : vector<4x8x1xf32>
      %154 = math.exp %153 : vector<4x8x1xf32>
      %155 = vector.broadcast %152 : vector<4x8x1xf32> to vector<4x8x8xf32>
      %156 = arith.subf %148, %155 : vector<4x8x8xf32>
      %157 = math.exp %156 : vector<4x8x8xf32>
      %c0_85 = arith.constant 0 : index
      %c0_86 = arith.constant 0 : index
      %c0_87 = arith.constant 0 : index
      %158 = vector.load %arg22[%c0_85, %c0_86, %c0_87] : memref<4x8x1xf32, #tpu.memory_space<vmem>>, vector<4x8x1xf32>
      %159 = arith.mulf %154, %158 : vector<4x8x1xf32>
      %cst_88 = arith.constant dense<0.000000e+00> : vector<4x8xf32>
      %160 = vector.multi_reduction <add>, %157, %cst_88 [2] : vector<4x8x8xf32> to vector<4x8xf32>
      %161 = vector.shape_cast %160 : vector<4x8xf32> to vector<4x8x1xf32>
      %162 = arith.addf %159, %161 : vector<4x8x1xf32>
      %c0_89 = arith.constant 0 : index
      %c0_90 = arith.constant 0 : index
      %c0_91 = arith.constant 0 : index
      %163 = vector.load %arg22[%c0_89, %c0_90, %c0_91] : memref<4x8x1xf32, #tpu.memory_space<vmem>>, vector<4x8x1xf32>
      tpu.vector_store %arg22[%c0_89, %c0_90, %c0_91], %162 {strides = array<i32>} : memref<4x8x1xf32, #tpu.memory_space<vmem>>, vector<4x8x1xf32>,
      %c0_92 = arith.constant 0 : index
      %c0_93 = arith.constant 0 : index
      %c0_94 = arith.constant 0 : index
      %164 = vector.load %arg23[%c0_92, %c0_93, %c0_94] : memref<4x8x8xf32, #tpu.memory_space<vmem>>, vector<4x8x8xf32>
      %165 = vector.broadcast %154 : vector<4x8x1xf32> to vector<4x8x8xf32>
      %166 = arith.mulf %165, %164 : vector<4x8x8xf32>
      %167 = arith.truncf %157 : vector<4x8x8xf32> to vector<4x8x8xbf16>
      "tpu.trace_start"() <{level = 10 : i32, message = "hqk,hkd->hqd"}> : () -> ()
      %cst_95 = arith.constant dense<0.000000e+00> : vector<4x8x8xf32>
      %168 = tpu.matmul %167, %135, %cst_95 {dimension_numbers = #tpu.dot_dimension_numbers<[2], [1], [1], [2], [0, 0, 0, 1, 1, 2], [0], [0]>} : vector<4x8x8xbf16>, vector<4x8x8xbf16>, vector<4x8x8xf32> -> vector<4x8x8xf32>
      "tpu.trace_stop"() : () -> ()
      %169 = arith.addf %166, %168 : vector<4x8x8xf32>
      %c0_96 = arith.constant 0 : index
      %c0_97 = arith.constant 0 : index
      %c0_98 = arith.constant 0 : index
      %170 = vector.load %arg23[%c0_96, %c0_97, %c0_98] : memref<4x8x8xf32, #tpu.memory_space<vmem>>, vector<4x8x8xf32>
      tpu.vector_store %arg23[%c0_96, %c0_97, %c0_98], %169 {strides = array<i32>} : memref<4x8x8xf32, #tpu.memory_space<vmem>>, vector<4x8x8xf32>,
      %c0_99 = arith.constant 0 : index
      %c0_100 = arith.constant 0 : index
      %c0_101 = arith.constant 0 : index
      %171 = vector.load %arg21[%c0_99, %c0_100, %c0_101] : memref<4x8x1xf32, #tpu.memory_space<vmem>>, vector<4x8x1xf32>
      tpu.vector_store %arg21[%c0_99, %c0_100, %c0_101], %152 {strides = array<i32>} : memref<4x8x1xf32, #tpu.memory_space<vmem>>, vector<4x8x1xf32>,
    }
    %c0_36 = arith.constant 0 : index
    %c0_37 = arith.constant 0 : index
    %c0_38 = arith.constant 0 : index
    %59 = vector.load %arg23[%c0_36, %c0_37, %c0_38] : memref<4x8x8xf32, #tpu.memory_space<vmem>>, vector<4x8x8xf32>
    %c0_39 = arith.constant 0 : index
    %c0_40 = arith.constant 0 : index
    %c0_41 = arith.constant 0 : index
    %60 = vector.load %arg22[%c0_39, %c0_40, %c0_41] : memref<4x8x1xf32, #tpu.memory_space<vmem>>, vector<4x8x1xf32>
    %61 = tpu.reciprocal %60 {approx = true} : vector<4x8x1xf32> -> vector<4x8x1xf32>
    %62 = vector.broadcast %61 : vector<4x8x1xf32> to vector<4x8x8xf32>
    %63 = arith.mulf %59, %62 : vector<4x8x8xf32>
    %64 = vector.extract_strided_slice %63 {offsets = [0, 0, 0], sizes = [1, 8, 8], strides = [1, 1, 1]} : vector<4x8x8xf32> to vector<1x8x8xf32>
    %65 = vector.shape_cast %64 : vector<1x8x8xf32> to vector<8x8xf32>
    %66 = vector.extract_strided_slice %63 {offsets = [1, 0, 0], sizes = [1, 8, 8], strides = [1, 1, 1]} : vector<4x8x8xf32> to vector<1x8x8xf32>
    %67 = vector.shape_cast %66 : vector<1x8x8xf32> to vector<8x8xf32>
    %68 = vector.extract_strided_slice %63 {offsets = [2, 0, 0], sizes = [1, 8, 8], strides = [1, 1, 1]} : vector<4x8x8xf32> to vector<1x8x8xf32>
    %69 = vector.shape_cast %68 : vector<1x8x8xf32> to vector<8x8xf32>
    %70 = vector.extract_strided_slice %63 {offsets = [3, 0, 0], sizes = [1, 8, 8], strides = [1, 1, 1]} : vector<4x8x8xf32> to vector<1x8x8xf32>
    %71 = vector.shape_cast %70 : vector<1x8x8xf32> to vector<8x8xf32>
    %72 = tpu.concatenate %65, %67, %69, %71 in 1 : vector<8x8xf32>, vector<8x8xf32>, vector<8x8xf32>, vector<8x8xf32> -> vector<8x32xf32>
    %73 = arith.truncf %72 : vector<8x32xf32> to vector<8x32xbf16>
    %c0_42 = arith.constant 0 : index
    %c0_43 = arith.constant 0 : index
    %74 = vector.load %arg10[%c0_42, %c0_43] : memref<32x32xbf16, #tpu.memory_space<vmem>>, vector<32x32xbf16>
    %cst_44 = arith.constant dense<0.000000e+00> : vector<8x32xf32>
    %75 = tpu.matmul %73, %74, %cst_44 {dimension_numbers = #tpu.dot_dimension_numbers<[1], [0], [0], [1], [0, 0, 1, 1], [], []>} : vector<8x32xbf16>, vector<32x32xbf16>, vector<8x32xf32> -> vector<8x32xf32>
    %c0_45 = arith.constant 0 : index
    %c0_46 = arith.constant 0 : index
    %76 = vector.load %arg11[%c0_45, %c0_46] : memref<1x32xf32, #tpu.memory_space<vmem>>, vector<1x32xf32>
    %77 = vector.broadcast %76 : vector<1x32xf32> to vector<8x32xf32>
    %78 = arith.addf %75, %77 : vector<8x32xf32>
    %79 = arith.addf %4, %78 : vector<8x32xf32>
    %c0_47 = arith.constant 0 : index
    %c0_48 = arith.constant 0 : index
    %80 = vector.load %arg12[%c0_47, %c0_48] : memref<1x32xf32, #tpu.memory_space<vmem>>, vector<1x32xf32>
    %c0_49 = arith.constant 0 : index
    %c0_50 = arith.constant 0 : index
    %81 = vector.load %arg13[%c0_49, %c0_50] : memref<1x32xf32, #tpu.memory_space<vmem>>, vector<1x32xf32>
    %cst_51 = arith.constant dense<0.000000e+00> : vector<8xf32>
    %82 = vector.multi_reduction <add>, %79, %cst_51 [1] : vector<8x32xf32> to vector<8xf32>
    %83 = vector.shape_cast %82 : vector<8xf32> to vector<8x1xf32>
    %cst_52 = arith.constant 3.200000e+01 : f32
    %84 = vector.broadcast %cst_52 : f32 to vector<8x1xf32>
    %85 = arith.divf %83, %84 : vector<8x1xf32>
    %86 = vector.broadcast %85 : vector<8x1xf32> to vector<8x32xf32>
    %87 = arith.subf %79, %86 : vector<8x32xf32>
    %88 = arith.mulf %87, %87 : vector<8x32xf32>
    %cst_53 = arith.constant dense<0.000000e+00> : vector<8xf32>
    %89 = vector.multi_reduction <add>, %88, %cst_53 [1] : vector<8x32xf32> to vector<8xf32>
    %90 = vector.shape_cast %89 : vector<8xf32> to vector<8x1xf32>
    %cst_54 = arith.constant 3.200000e+01 : f32
    %91 = vector.broadcast %cst_54 : f32 to vector<8x1xf32>
    %92 = arith.divf %90, %91 : vector<8x1xf32>
    %93 = vector.broadcast %85 : vector<8x1xf32> to vector<8x32xf32>
    %94 = arith.subf %79, %93 : vector<8x32xf32>
    %cst_55 = arith.constant 9.99999974E-6 : f32
    %95 = vector.broadcast %cst_55 : f32 to vector<8x1xf32>
    %96 = arith.addf %92, %95 : vector<8x1xf32>
    %97 = math.rsqrt %96 : vector<8x1xf32>
    %98 = vector.broadcast %97 : vector<8x1xf32> to vector<8x32xf32>
    %99 = arith.mulf %94, %98 : vector<8x32xf32>
    %100 = vector.broadcast %80 : vector<1x32xf32> to vector<8x32xf32>
    %101 = arith.mulf %99, %100 : vector<8x32xf32>
    %102 = vector.broadcast %81 : vector<1x32xf32> to vector<8x32xf32>
    %103 = arith.addf %101, %102 : vector<8x32xf32>
    %104 = arith.truncf %103 : vector<8x32xf32> to vector<8x32xbf16>
    %c0_56 = arith.constant 0 : index
    %c0_57 = arith.constant 0 : index
    %105 = vector.load %arg14[%c0_56, %c0_57] : memref<32x128xbf16, #tpu.memory_space<vmem>>, vector<32x128xbf16>
    %cst_58 = arith.constant dense<0.000000e+00> : vector<8x128xf32>
    %106 = tpu.matmul %104, %105, %cst_58 {dimension_numbers = #tpu.dot_dimension_numbers<[1], [0], [0], [1], [0, 0, 1, 1], [], []>} : vector<8x32xbf16>, vector<32x128xbf16>, vector<8x128xf32> -> vector<8x128xf32>
    %c0_59 = arith.constant 0 : index
    %c0_60 = arith.constant 0 : index
    %107 = vector.load %arg15[%c0_59, %c0_60] : memref<1x128xf32, #tpu.memory_space<vmem>>, vector<1x128xf32>
    %108 = vector.broadcast %107 : vector<1x128xf32> to vector<8x128xf32>
    %109 = arith.addf %106, %108 : vector<8x128xf32>
    %cst_61 = arith.constant 5.000000e-01 : f32
    %110 = vector.broadcast %cst_61 : f32 to vector<8x128xf32>
    %111 = arith.mulf %110, %109 : vector<8x128xf32>
    %cst_62 = arith.constant 0.707106769 : f32
    %112 = vector.broadcast %cst_62 : f32 to vector<8x128xf32>
    %113 = arith.mulf %109, %112 : vector<8x128xf32>
    %114 = math.erf %113 : vector<8x128xf32>
    %cst_63 = arith.constant 1.000000e+00 : f32
    %115 = vector.broadcast %cst_63 : f32 to vector<8x128xf32>
    %116 = arith.addf %115, %114 : vector<8x128xf32>
    %117 = arith.mulf %111, %116 : vector<8x128xf32>
    %118 = arith.truncf %117 : vector<8x128xf32> to vector<8x128xbf16>
    %c0_64 = arith.constant 0 : index
    %c0_65 = arith.constant 0 : index
    %119 = vector.load %arg16[%c0_64, %c0_65] : memref<128x32xbf16, #tpu.memory_space<vmem>>, vector<128x32xbf16>
    %cst_66 = arith.constant dense<0.000000e+00> : vector<8x32xf32>
    %120 = tpu.matmul %118, %119, %cst_66 {dimension_numbers = #tpu.dot_dimension_numbers<[1], [0], [0], [1], [0, 0, 1, 1], [], []>} : vector<8x128xbf16>, vector<128x32xbf16>, vector<8x32xf32> -> vector<8x32xf32>
    %c0_67 = arith.constant 0 : index
    %c0_68 = arith.constant 0 : index
    %121 = vector.load %arg17[%c0_67, %c0_68] : memref<1x32xf32, #tpu.memory_space<vmem>>, vector<1x32xf32>
    %122 = vector.broadcast %121 : vector<1x32xf32> to vector<8x32xf32>
    %123 = arith.addf %120, %122 : vector<8x32xf32>
    %124 = arith.addf %79, %123 : vector<8x32xf32>
    %c0_69 = arith.constant 0 : index
    %c0_70 = arith.constant 0 : index
    %c0_71 = arith.constant 0 : index
    %125 = vector.load %arg18[%c0_69, %c0_70, %c0_71] : memref<1x8x32xf32, #tpu.memory_space<vmem>>, vector<1x8x32xf32>
    %126 = vector.shape_cast %125 : vector<1x8x32xf32> to vector<8x32xf32>
    %127 = vector.shape_cast %124 : vector<8x32xf32> to vector<1x8x32xf32>
    tpu.vector_store %arg18[%c0_69, %c0_70, %c0_71], %127 {strides = array<i32>} : memref<1x8x32xf32, #tpu.memory_space<vmem>>, vector<1x8x32xf32>,
    return
  }
  func.func @transform_0(%arg0: i32, %arg1: i32) -> (i32, i32, i32) {
    %c0_i32 = arith.constant 0 : i32
    %c0_i32_0 = arith.constant 0 : i32
    return %arg0, %arg1, %c0_i32 : i32, i32, i32
  }
  func.func @transform_1(%arg0: i32, %arg1: i32) -> (i32, i32, i32) {
    %c0_i32 = arith.constant 0 : i32
    %c0_i32_0 = arith.constant 0 : i32
    %c0_i32_1 = arith.constant 0 : i32
    return %arg0, %c0_i32, %c0_i32_0 : i32, i32, i32
  }
  func.func @transform_2(%arg0: i32, %arg1: i32) -> (i32, i32) {
    %c0_i32 = arith.constant 0 : i32
    %c0_i32_0 = arith.constant 0 : i32
    %c0_i32_1 = arith.constant 0 : i32
    return %c0_i32, %c0_i32_0 : i32, i32
  }
  func.func @transform_3(%arg0: i32, %arg1: i32) -> (i32, i32) {
    %c0_i32 = arith.constant 0 : i32
    %c0_i32_0 = arith.constant 0 : i32
    %c0_i32_1 = arith.constant 0 : i32
    return %c0_i32, %c0_i32_0 : i32, i32
  }
  func.func @transform_4(%arg0: i32, %arg1: i32) -> (i32, i32) {
    %c0_i32 = arith.constant 0 : i32
    %c0_i32_0 = arith.constant 0 : i32
    %c0_i32_1 = arith.constant 0 : i32
    return %c0_i32, %c0_i32_0 : i32, i32
  }
  func.func @transform_5(%arg0: i32, %arg1: i32) -> (i32, i32) {
    %c0_i32 = arith.constant 0 : i32
    %c0_i32_0 = arith.constant 0 : i32
    %c0_i32_1 = arith.constant 0 : i32
    return %c0_i32, %c0_i32_0 : i32, i32
  }
  func.func @transform_6(%arg0: i32, %arg1: i32) -> (i32, i32) {
    %c0_i32 = arith.constant 0 : i32
    %c0_i32_0 = arith.constant 0 : i32
    %c0_i32_1 = arith.constant 0 : i32
    return %c0_i32, %c0_i32_0 : i32, i32
  }
  func.func @transform_7(%arg0: i32, %arg1: i32) -> (i32, i32) {
    %c0_i32 = arith.constant 0 : i32
    %c0_i32_0 = arith.constant 0 : i32
    %c0_i32_1 = arith.constant 0 : i32
    return %c0_i32, %c0_i32_0 : i32, i32
  }
  func.func @transform_8(%arg0: i32, %arg1: i32) -> (i32, i32) {
    %c0_i32 = arith.constant 0 : i32
    %c0_i32_0 = arith.constant 0 : i32
    %c0_i32_1 = arith.constant 0 : i32
    return %c0_i32, %c0_i32_0 : i32, i32
  }
  func.func @transform_9(%arg0: i32, %arg1: i32) -> (i32, i32) {
    %c0_i32 = arith.constant 0 : i32
    %c0_i32_0 = arith.constant 0 : i32
    %c0_i32_1 = arith.constant 0 : i32
    return %c0_i32, %c0_i32_0 : i32, i32
  }
  func.func @transform_10(%arg0: i32, %arg1: i32) -> (i32, i32) {
    %c0_i32 = arith.constant 0 : i32
    %c0_i32_0 = arith.constant 0 : i32
    %c0_i32_1 = arith.constant 0 : i32
    return %c0_i32, %c0_i32_0 : i32, i32
  }
  func.func @transform_11(%arg0: i32, %arg1: i32) -> (i32, i32) {
    %c0_i32 = arith.constant 0 : i32
    %c0_i32_0 = arith.constant 0 : i32
    %c0_i32_1 = arith.constant 0 : i32
    return %c0_i32, %c0_i32_0 : i32, i32
  }
  func.func @transform_12(%arg0: i32, %arg1: i32) -> (i32, i32) {
    %c0_i32 = arith.constant 0 : i32
    %c0_i32_0 = arith.constant 0 : i32
    %c0_i32_1 = arith.constant 0 : i32
    return %c0_i32, %c0_i32_0 : i32, i32
  }
  func.func @transform_13(%arg0: i32, %arg1: i32) -> (i32, i32) {
    %c0_i32 = arith.constant 0 : i32
    %c0_i32_0 = arith.constant 0 : i32
    %c0_i32_1 = arith.constant 0 : i32
    return %c0_i32, %c0_i32_0 : i32, i32
  }
  func.func @transform_14(%arg0: i32, %arg1: i32) -> (i32, i32) {
    %c0_i32 = arith.constant 0 : i32
    %c0_i32_0 = arith.constant 0 : i32
    %c0_i32_1 = arith.constant 0 : i32
    return %c0_i32, %c0_i32_0 : i32, i32
  }
  func.func @transform_15(%arg0: i32, %arg1: i32) -> (i32, i32) {
    %c0_i32 = arith.constant 0 : i32
    %c0_i32_0 = arith.constant 0 : i32
    %c0_i32_1 = arith.constant 0 : i32
    return %c0_i32, %c0_i32_0 : i32, i32
  }
  func.func @transform_16(%arg0: i32, %arg1: i32) -> (i32, i32, i32) {
    %c0_i32 = arith.constant 0 : i32
    %c0_i32_0 = arith.constant 0 : i32
    return %arg0, %arg1, %c0_i32 : i32, i32, i32
  }
}

</mosaic_0001>

<llo_original>
// kernel: tpu_custom_call.1
$region0: #{tpu_custom_call.1}
  #allocation0 [shape = 'u32[]', space=smem, size = 0x4, offset = 0x4, fixed_abs, tag = 'smem constant byte address 0x4 - core index']
  #allocation1 [shape = 'u32[72,128]{1,0:T(1,128)}', space=vmem, size = 0x9000, scoped, tag = 'internal scratch']
  #allocation2 [shape = 'bf16[2,4,8,8]{3,2,1,0:T(8,128)(2,1)}', space=vmem, size = 0x4000, scoped, tag = 'scratch operand']
  #allocation3 [shape = 'bf16[2,4,8,8]{3,2,1,0:T(8,128)(2,1)}', space=vmem, size = 0x4000, scoped, tag = 'scratch operand']
  #allocation4 [shape = 'f32[4,8,1]{2,1,0:T(8,128)}', space=vmem, size = 0x4000, scoped, tag = 'scratch operand']
  #allocation5 [shape = 'f32[4,8,1]{2,1,0:T(8,128)}', space=vmem, size = 0x4000, scoped, tag = 'scratch operand']
  #allocation6 [shape = 'f32[4,8,8]{2,1,0:T(8,128)}', space=vmem, size = 0x4000, scoped, tag = 'scratch operand']
  %s0 = inlined_call_operand.vmem [shape: f32[2,16,32], index: 0, kind: input, shape index: {}]
  %s1 = inlined_call_operand.vmem [shape: f32[2,16,32], index: 1, kind: input, shape index: {}]
  %s2 = inlined_call_operand.vmem [shape: f32[1,32], index: 2, kind: input, shape index: {}]
  %s3 = inlined_call_operand.vmem [shape: f32[1,32], index: 3, kind: input, shape index: {}]
  %s4 = inlined_call_operand.vmem [shape: bf16[32,32], index: 4, kind: input, shape index: {}]
  %s5 = inlined_call_operand.vmem [shape: f32[1,32], index: 5, kind: input, shape index: {}]
  %s6 = inlined_call_operand.hbm [shape: bf16[32,64], index: 6, kind: input, shape index: {}]
  %s7 = inlined_call_operand.vmem [shape: f32[1,64], index: 7, kind: input, shape index: {}]
  %s8 = inlined_call_operand.hbm [shape: bf16[32,32], index: 8, kind: input, shape index: {}]
  %s9 = inlined_call_operand.vmem [shape: f32[1,32], index: 9, kind: input, shape index: {}]
  %s10 = inlined_call_operand.vmem [shape: f32[1,32], index: 10, kind: input, shape index: {}]
  %s11 = inlined_call_operand.vmem [shape: f32[1,32], index: 11, kind: input, shape index: {}]
  %s12 = inlined_call_operand.hbm [shape: bf16[32,128], index: 12, kind: input, shape index: {}]
  %s13 = inlined_call_operand.vmem [shape: f32[1,128], index: 13, kind: input, shape index: {}]
  %s14 = inlined_call_operand.vmem [shape: bf16[128,32], index: 14, kind: input, shape index: {}]
  %s15 = inlined_call_operand.vmem [shape: f32[1,32], index: 15, kind: input, shape index: {}]
  %s16 = inlined_call_operand.hbm [shape: f32[2,16,32], index: 16, kind: output, shape index: {}]
  %s17 = sld [smem:[#allocation0]]
  $region120: #{tpu_custom_call.1} parent=0
    _
  %s19 = ssub.s32 1, %s17
  %s20 = scalar_select 0, %s19, %s17
  $region1: #{tpu_custom_call.1} parent=0
    #allocation7 [shape = 'u8[8192]{0}', space=vmem, size = 0x2000, scoped, tag = 'input window, operand 6, single buffered']
    #allocation8 [shape = 's32[2]{0}', space=sflag, size = 0x8, scoped, tag = 'scoped memory for tpu_custom_call.1']
    #allocation9 [shape = 's32[2]{0}', space=sflag, size = 0x8, scoped, tag = 'scoped memory for tpu_custom_call.1']
    #allocation10 [shape = 'u8[8192]{0}', space=vmem, size = 0x2000, scoped, tag = 'input window, operand 8, single buffered']
    #allocation11 [shape = 's32[1]{0}', space=sflag, size = 0x4, scoped, tag = 'scoped memory for tpu_custom_call.1']
    #allocation12 [shape = 'u8[8192]{0}', space=vmem, size = 0x2000, scoped, tag = 'input window, operand 12, single buffered']
    #allocation13 [shape = 'u8[8192]{0}', space=vmem, size = 0x2000, scoped, tag = 'output window, operand 0']
    %21 = vsyncpa [#allocation8], 0
    %22 = vsyncpa [#allocation11], 0
    %23 = vsyncpa [#allocation9], 0
    %s24 = scalar_lea.sflag [#allocation9], 1
    %25 = vsyncpa %s24, 0
    loop: start=0, step=1, limit=6
    $region2: #{tpu_custom_call.1} parent=1 // loop_pre_header
      _
    $region3: #{tpu_custom_call.1} parent=1 // loop_header
      %s27 = sphi 0, %s31
      %p28 = scmp.ge.s32.totalorder %s27, 6
      %s34 = sphi 0, %s46
      %s35 = sphi 0, %s42
      %s36 = sphi 0, %s34
      %s37 = sphi 0, %s35
      %s38 = sphi 0, %s36
      %s39 = sphi 0, %s37
      %s51 = sphi 0, %s53
      %s54 = sphi 0, %s51
      %s55 = sphi 0, %s54
      %s71 = sphi 0, %s55
      %s77 = sphi 0, %s79
      %s80 = sphi 0, %s77
      %s81 = sphi 0, %s80
      %s97 = sphi 0, %s81
      %s101 = sphi 0, %s101
      %s103 = sphi 0, %s101
      %s104 = sphi 0, %s103
      %s118 = sphi 0, %s104
      %s122 = sphi 0, %s122
      %s124 = sphi 0, %s122
      %s125 = sphi 0, %s124
      %s139 = sphi 0, %s125
      %s143 = sphi 0, %s143
      %s145 = sphi 0, %s143
      %s146 = sphi 0, %s145
      %s160 = sphi 0, %s146
      %s164 = sphi 0, %s164
      %s166 = sphi 0, %s164
      %s167 = sphi 0, %s166
      %s181 = sphi 0, %s167
      %s185 = sphi 0, %s185
      %s187 = sphi 0, %s185
      %s188 = sphi 0, %s187
      %s202 = sphi 0, %s188
      %s206 = sphi 0, %s206
      %s208 = sphi 0, %s206
      %s209 = sphi 0, %s208
      %s223 = sphi 0, %s209
      %s227 = sphi 0, %s227
      %s229 = sphi 0, %s227
      %s230 = sphi 0, %s229
      %s244 = sphi 0, %s230
      %s248 = sphi 0, %s248
      %s250 = sphi 0, %s248
      %s251 = sphi 0, %s250
      %s265 = sphi 0, %s251
      %s269 = sphi 0, %s269
      %s271 = sphi 0, %s269
      %s272 = sphi 0, %s271
      %s286 = sphi 0, %s272
      %s290 = sphi 0, %s290
      %s292 = sphi 0, %s290
      %s293 = sphi 0, %s292
      %s307 = sphi 0, %s293
      %s311 = sphi 0, %s311
      %s313 = sphi 0, %s311
      %s314 = sphi 0, %s313
      %s328 = sphi 0, %s314
      %s332 = sphi 0, %s332
      %s334 = sphi 0, %s332
      %s335 = sphi 0, %s334
      %s349 = sphi 0, %s335
      %s353 = sphi 0, %s353
      %s355 = sphi 0, %s353
      %s356 = sphi 0, %s355
      %s370 = sphi 0, %s356
      %s374 = sphi 0, %s374
      %s376 = sphi 0, %s374
      %s377 = sphi 0, %s376
      %s391 = sphi 0, %s377
      %s399 = sphi 0, %s401
      %s402 = sphi 0, %s399
      %s403 = sphi 0, %s402
      %s419 = sphi 0, %s403
    $region4: #{tpu_custom_call.1} parent=1 // loop_header_branch
      %30 = sbr.rel (%p28) target = $region8
    $region5: #{tpu_custom_call.1} parent=1 // loop_body
      %s32 = ssub.s32 %s27, 1
      %s33 = ssub.s32 %s27, 2
      %s40 = sadd.s32 1, %s35
      %p41 = scmp.ge.s32.totalorder %s40, 2
      %s42 = scalar_select %p41, 0, %s40
      %s43 = sadd.s32 1, %s34
      %s44 = scalar_select %p41, %s43, %s34
      %p45 = scmp.ge.s32.totalorder %s44, 2
      %s46 = scalar_select %p45, 0, %s44
      %s47 = ssub.s32 %s34, %s46
      %s48 = ssub.s32 %s35, %s42
      %s49 = sor.u32 %s47, %s48
      %p50 = scmp.eq.s32.totalorder %s49, 0
      %s52 = sadd.s32 %s51, 1
      %s53 = scalar_select %p50, %s51, %s52
      %p56 = pneg %p50
      %p57 = scmp.eq.s32.totalorder %s27, 3
      %p58 = por %p56, %p57
      %p59 = scmp.ne.s32.totalorder %s51, %s54
      %p60 = scmp.eq.s32.totalorder %s27, 0
      %p61 = por %p59, %p60
      %p62 = scmp.ne.s32.totalorder %s51, %s54
      %p63 = scmp.eq.s32.totalorder %s32, 3
      %p64 = por %p62, %p63
      %p65 = scmp.ne.s32.totalorder %s54, %s55
      %p66 = scmp.eq.s32.totalorder %s32, 0
      %p67 = por %p65, %p66
      %p68 = scmp.ne.s32.totalorder %s54, %s55
      %p69 = scmp.eq.s32.totalorder %s33, 3
      %p70 = por %p68, %p69
      %p72 = scmp.ne.s32.totalorder %s55, %s71
      %p73 = scmp.eq.s32.totalorder %s33, 0
      %p74 = por %p72, %p73
      %s75 = ssub.s32 %s34, %s46
      %p76 = scmp.eq.s32.totalorder %s75, 0
      %s78 = sadd.s32 %s77, 1
      %s79 = scalar_select %p76, %s77, %s78
      %p82 = pneg %p76
      %p83 = scmp.eq.s32.totalorder %s27, 3
      %p84 = por %p82, %p83
      %p85 = scmp.ne.s32.totalorder %s77, %s80
      %p86 = scmp.eq.s32.totalorder %s27, 0
      %p87 = por %p85, %p86
      %p88 = scmp.ne.s32.totalorder %s77, %s80
      %p89 = scmp.eq.s32.totalorder %s32, 3
      %p90 = por %p88, %p89
      %p91 = scmp.ne.s32.totalorder %s80, %s81
      %p92 = scmp.eq.s32.totalorder %s32, 0
      %p93 = por %p91, %p92
      %p94 = scmp.ne.s32.totalorder %s80, %s81
      %p95 = scmp.eq.s32.totalorder %s33, 3
      %p96 = por %p94, %p95
      %p98 = scmp.ne.s32.totalorder %s81, %s97
      %p99 = scmp.eq.s32.totalorder %s33, 0
      %p100 = por %p98, %p99
      %s102 = sadd.s32 %s101, 1
      %p105 = scmp.eq.s32.totalorder %s27, 3
      %p106 = scmp.ne.s32.totalorder %s101, %s103
      %p107 = scmp.eq.s32.totalorder %s27, 0
      %p108 = por %p106, %p107
      %p109 = scmp.ne.s32.totalorder %s101, %s103
      %p110 = scmp.eq.s32.totalorder %s32, 3
      %p111 = por %p109, %p110
      %p112 = scmp.ne.s32.totalorder %s103, %s104
      %p113 = scmp.eq.s32.totalorder %s32, 0
      %p114 = por %p112, %p113
      %p115 = scmp.ne.s32.totalorder %s103, %s104
      %p116 = scmp.eq.s32.totalorder %s33, 3
      %p117 = por %p115, %p116
      %p119 = scmp.ne.s32.totalorder %s104, %s118
      %p120 = scmp.eq.s32.totalorder %s33, 0
      %p121 = por %p119, %p120
      %s123 = sadd.s32 %s122, 1
      %p126 = scmp.eq.s32.totalorder %s27, 3
      %p127 = scmp.ne.s32.totalorder %s122, %s124
      %p128 = scmp.eq.s32.totalorder %s27, 0
      %p129 = por %p127, %p128
      %p130 = scmp.ne.s32.totalorder %s122, %s124
      %p131 = scmp.eq.s32.totalorder %s32, 3
      %p132 = por %p130, %p131
      %p133 = scmp.ne.s32.totalorder %s124, %s125
      %p134 = scmp.eq.s32.totalorder %s32, 0
      %p135 = por %p133, %p134
      %p136 = scmp.ne.s32.totalorder %s124, %s125
      %p137 = scmp.eq.s32.totalorder %s33, 3
      %p138 = por %p136, %p137
      %p140 = scmp.ne.s32.totalorder %s125, %s139
      %p141 = scmp.eq.s32.totalorder %s33, 0
      %p142 = por %p140, %p141
      %s144 = sadd.s32 %s143, 1
      %p147 = scmp.eq.s32.totalorder %s27, 3
      %p148 = scmp.ne.s32.totalorder %s143, %s145
      %p149 = scmp.eq.s32.totalorder %s27, 0
      %p150 = por %p148, %p149
      %p151 = scmp.ne.s32.totalorder %s143, %s145
      %p152 = scmp.eq.s32.totalorder %s32, 3
      %p153 = por %p151, %p152
      %p154 = scmp.ne.s32.totalorder %s145, %s146
      %p155 = scmp.eq.s32.totalorder %s32, 0
      %p156 = por %p154, %p155
      %p157 = scmp.ne.s32.totalorder %s145, %s146
      %p158 = scmp.eq.s32.totalorder %s33, 3
      %p159 = por %p157, %p158
      %p161 = scmp.ne.s32.totalorder %s146, %s160
      %p162 = scmp.eq.s32.totalorder %s33, 0
      %p163 = por %p161, %p162
      %s165 = sadd.s32 %s164, 1
      %p168 = scmp.eq.s32.totalorder %s27, 3
      %p169 = scmp.ne.s32.totalorder %s164, %s166
      %p170 = scmp.eq.s32.totalorder %s27, 0
      %p171 = por %p169, %p170
      %p172 = scmp.ne.s32.totalorder %s164, %s166
      %p173 = scmp.eq.s32.totalorder %s32, 3
      %p174 = por %p172, %p173
      %p175 = scmp.ne.s32.totalorder %s166, %s167
      %p176 = scmp.eq.s32.totalorder %s32, 0
      %p177 = por %p175, %p176
      %p178 = scmp.ne.s32.totalorder %s166, %s167
      %p179 = scmp.eq.s32.totalorder %s33, 3
      %p180 = por %p178, %p179
      %p182 = scmp.ne.s32.totalorder %s167, %s181
      %p183 = scmp.eq.s32.totalorder %s33, 0
      %p184 = por %p182, %p183
      %s186 = sadd.s32 %s185, 1
      %p189 = scmp.eq.s32.totalorder %s27, 3
      %p190 = scmp.ne.s32.totalorder %s185, %s187
      %p191 = scmp.eq.s32.totalorder %s27, 0
      %p192 = por %p190, %p191
      %p193 = scmp.ne.s32.totalorder %s185, %s187
      %p194 = scmp.eq.s32.totalorder %s32, 3
      %p195 = por %p193, %p194
      %p196 = scmp.ne.s32.totalorder %s187, %s188
      %p197 = scmp.eq.s32.totalorder %s32, 0
      %p198 = por %p196, %p197
      %p199 = scmp.ne.s32.totalorder %s187, %s188
      %p200 = scmp.eq.s32.totalorder %s33, 3
      %p201 = por %p199, %p200
      %p203 = scmp.ne.s32.totalorder %s188, %s202
      %p204 = scmp.eq.s32.totalorder %s33, 0
      %p205 = por %p203, %p204
      %s207 = sadd.s32 %s206, 1
      %p210 = scmp.eq.s32.totalorder %s27, 3
      %p211 = scmp.ne.s32.totalorder %s206, %s208
      %p212 = scmp.eq.s32.totalorder %s27, 0
      %p213 = por %p211, %p212
      %p214 = scmp.ne.s32.totalorder %s206, %s208
      %p215 = scmp.eq.s32.totalorder %s32, 3
      %p216 = por %p214, %p215
      %p217 = scmp.ne.s32.totalorder %s208, %s209
      %p218 = scmp.eq.s32.totalorder %s32, 0
      %p219 = por %p217, %p218
      %p220 = scmp.ne.s32.totalorder %s208, %s209
      %p221 = scmp.eq.s32.totalorder %s33, 3
      %p222 = por %p220, %p221
      %p224 = scmp.ne.s32.totalorder %s209, %s223
      %p225 = scmp.eq.s32.totalorder %s33, 0
      %p226 = por %p224, %p225
      %s228 = sadd.s32 %s227, 1
      %p231 = scmp.eq.s32.totalorder %s27, 3
      %p232 = scmp.ne.s32.totalorder %s227, %s229
      %p233 = scmp.eq.s32.totalorder %s27, 0
      %p234 = por %p232, %p233
      %p235 = scmp.ne.s32.totalorder %s227, %s229
      %p236 = scmp.eq.s32.totalorder %s32, 3
      %p237 = por %p235, %p236
      %p238 = scmp.ne.s32.totalorder %s229, %s230
      %p239 = scmp.eq.s32.totalorder %s32, 0
      %p240 = por %p238, %p239
      %p241 = scmp.ne.s32.totalorder %s229, %s230
      %p242 = scmp.eq.s32.totalorder %s33, 3
      %p243 = por %p241, %p242
      %p245 = scmp.ne.s32.totalorder %s230, %s244
      %p246 = scmp.eq.s32.totalorder %s33, 0
      %p247 = por %p245, %p246
      %s249 = sadd.s32 %s248, 1
      %p252 = scmp.eq.s32.totalorder %s27, 3
      %p253 = scmp.ne.s32.totalorder %s248, %s250
      %p254 = scmp.eq.s32.totalorder %s27, 0
      %p255 = por %p253, %p254
      %p256 = scmp.ne.s32.totalorder %s248, %s250
      %p257 = scmp.eq.s32.totalorder %s32, 3
      %p258 = por %p256, %p257
      %p259 = scmp.ne.s32.totalorder %s250, %s251
      %p260 = scmp.eq.s32.totalorder %s32, 0
      %p261 = por %p259, %p260
      %p262 = scmp.ne.s32.totalorder %s250, %s251
      %p263 = scmp.eq.s32.totalorder %s33, 3
      %p264 = por %p262, %p263
      %p266 = scmp.ne.s32.totalorder %s251, %s265
      %p267 = scmp.eq.s32.totalorder %s33, 0
      %p268 = por %p266, %p267
      %s270 = sadd.s32 %s269, 1
      %p273 = scmp.eq.s32.totalorder %s27, 3
      %p274 = scmp.ne.s32.totalorder %s269, %s271
      %p275 = scmp.eq.s32.totalorder %s27, 0
      %p276 = por %p274, %p275
      %p277 = scmp.ne.s32.totalorder %s269, %s271
      %p278 = scmp.eq.s32.totalorder %s32, 3
      %p279 = por %p277, %p278
      %p280 = scmp.ne.s32.totalorder %s271, %s272
      %p281 = scmp.eq.s32.totalorder %s32, 0
      %p282 = por %p280, %p281
      %p283 = scmp.ne.s32.totalorder %s271, %s272
      %p284 = scmp.eq.s32.totalorder %s33, 3
      %p285 = por %p283, %p284
      %p287 = scmp.ne.s32.totalorder %s272, %s286
      %p288 = scmp.eq.s32.totalorder %s33, 0
      %p289 = por %p287, %p288
      %s291 = sadd.s32 %s290, 1
      %p294 = scmp.eq.s32.totalorder %s27, 3
      %p295 = scmp.ne.s32.totalorder %s290, %s292
      %p296 = scmp.eq.s32.totalorder %s27, 0
      %p297 = por %p295, %p296
      %p298 = scmp.ne.s32.totalorder %s290, %s292
      %p299 = scmp.eq.s32.totalorder %s32, 3
      %p300 = por %p298, %p299
      %p301 = scmp.ne.s32.totalorder %s292, %s293
      %p302 = scmp.eq.s32.totalorder %s32, 0
      %p303 = por %p301, %p302
      %p304 = scmp.ne.s32.totalorder %s292, %s293
      %p305 = scmp.eq.s32.totalorder %s33, 3
      %p306 = por %p304, %p305
      %p308 = scmp.ne.s32.totalorder %s293, %s307
      %p309 = scmp.eq.s32.totalorder %s33, 0
      %p310 = por %p308, %p309
      %s312 = sadd.s32 %s311, 1
      %p315 = scmp.eq.s32.totalorder %s27, 3
      %p316 = scmp.ne.s32.totalorder %s311, %s313
      %p317 = scmp.eq.s32.totalorder %s27, 0
      %p318 = por %p316, %p317
      %p319 = scmp.ne.s32.totalorder %s311, %s313
      %p320 = scmp.eq.s32.totalorder %s32, 3
      %p321 = por %p319, %p320
      %p322 = scmp.ne.s32.totalorder %s313, %s314
      %p323 = scmp.eq.s32.totalorder %s32, 0
      %p324 = por %p322, %p323
      %p325 = scmp.ne.s32.totalorder %s313, %s314
      %p326 = scmp.eq.s32.totalorder %s33, 3
      %p327 = por %p325, %p326
      %p329 = scmp.ne.s32.totalorder %s314, %s328
      %p330 = scmp.eq.s32.totalorder %s33, 0
      %p331 = por %p329, %p330
      %s333 = sadd.s32 %s332, 1
      %p336 = scmp.eq.s32.totalorder %s27, 3
      %p337 = scmp.ne.s32.totalorder %s332, %s334
      %p338 = scmp.eq.s32.totalorder %s27, 0
      %p339 = por %p337, %p338
      %p340 = scmp.ne.s32.totalorder %s332, %s334
      %p341 = scmp.eq.s32.totalorder %s32, 3
      %p342 = por %p340, %p341
      %p343 = scmp.ne.s32.totalorder %s334, %s335
      %p344 = scmp.eq.s32.totalorder %s32, 0
      %p345 = por %p343, %p344
      %p346 = scmp.ne.s32.totalorder %s334, %s335
      %p347 = scmp.eq.s32.totalorder %s33, 3
      %p348 = por %p346, %p347
      %p350 = scmp.ne.s32.totalorder %s335, %s349
      %p351 = scmp.eq.s32.totalorder %s33, 0
      %p352 = por %p350, %p351
      %s354 = sadd.s32 %s353, 1
      %p357 = scmp.eq.s32.totalorder %s27, 3
      %p358 = scmp.ne.s32.totalorder %s353, %s355
      %p359 = scmp.eq.s32.totalorder %s27, 0
      %p360 = por %p358, %p359
      %p361 = scmp.ne.s32.totalorder %s353, %s355
      %p362 = scmp.eq.s32.totalorder %s32, 3
      %p363 = por %p361, %p362
      %p364 = scmp.ne.s32.totalorder %s355, %s356
      %p365 = scmp.eq.s32.totalorder %s32, 0
      %p366 = por %p364, %p365
      %p367 = scmp.ne.s32.totalorder %s355, %s356
      %p368 = scmp.eq.s32.totalorder %s33, 3
      %p369 = por %p367, %p368
      %p371 = scmp.ne.s32.totalorder %s356, %s370
      %p372 = scmp.eq.s32.totalorder %s33, 0
      %p373 = por %p371, %p372
      %s375 = sadd.s32 %s374, 1
      %p378 = scmp.eq.s32.totalorder %s27, 3
      %p379 = scmp.ne.s32.totalorder %s374, %s376
      %p380 = scmp.eq.s32.totalorder %s27, 0
      %p381 = por %p379, %p380
      %p382 = scmp.ne.s32.totalorder %s374, %s376
      %p383 = scmp.eq.s32.totalorder %s32, 3
      %p384 = por %p382, %p383
      %p385 = scmp.ne.s32.totalorder %s376, %s377
      %p386 = scmp.eq.s32.totalorder %s32, 0
      %p387 = por %p385, %p386
      %p388 = scmp.ne.s32.totalorder %s376, %s377
      %p389 = scmp.eq.s32.totalorder %s33, 3
      %p390 = por %p388, %p389
      %p392 = scmp.ne.s32.totalorder %s377, %s391
      %p393 = scmp.eq.s32.totalorder %s33, 0
      %p394 = por %p392, %p393
      %s395 = ssub.s32 %s34, %s46
      %s396 = ssub.s32 %s35, %s42
      %s397 = sor.u32 %s395, %s396
      %p398 = scmp.eq.s32.totalorder %s397, 0
      %s400 = sadd.s32 %s399, 1
      %s401 = scalar_select %p398, %s399, %s400
      %p404 = pneg %p398
      %p405 = scmp.eq.s32.totalorder %s27, 3
      %p406 = por %p404, %p405
      %p407 = scmp.ne.s32.totalorder %s399, %s402
      %p408 = scmp.eq.s32.totalorder %s27, 0
      %p409 = por %p407, %p408
      %p410 = scmp.ne.s32.totalorder %s399, %s402
      %p411 = scmp.eq.s32.totalorder %s32, 3
      %p412 = por %p410, %p411
      %p413 = scmp.ne.s32.totalorder %s402, %s403
      %p414 = scmp.eq.s32.totalorder %s32, 0
      %p415 = por %p413, %p414
      %p416 = scmp.ne.s32.totalorder %s402, %s403
      %p417 = scmp.eq.s32.totalorder %s33, 3
      %p418 = por %p416, %p417
      %p420 = scmp.ne.s32.totalorder %s403, %s419
      %p421 = scmp.eq.s32.totalorder %s33, 0
      %p422 = por %p420, %p421
      %p423 = scmp.le.s32.totalorder 1, %s27
      %p424 = scmp.lt.s32.totalorder %s27, 5
      %p425 = pnand %p423, %p424
      %p426 = pneg %p425
      // Predicated region
      $region9: #{tpu_custom_call.1} parent=5 // pred_check
        _
      $region10: #{tpu_custom_call.1} parent=5 // pred_check_branch
        %428 = sbr.rel (%p425) target = $region12
      $region11: #{tpu_custom_call.1} parent=5 // pred_region
        %s429 = ssub.s32 %s27, 1
        // Predicated region
        $region13: #{tpu_custom_call.1} parent=11 // pred_check
          %p430 = pneg %p114
        $region14: #{tpu_custom_call.1} parent=11 // pred_check_branch
          %432 = sbr.rel (%p430) target = $region16
        $region15: #{tpu_custom_call.1} parent=11 // pred_region
          _
        $region16: #{tpu_custom_call.1} parent=11 // pred_fallthru
          _
        // Predicated region
        $region17: #{tpu_custom_call.1} parent=11 // pred_check
          %p433 = pneg %p135
        $region18: #{tpu_custom_call.1} parent=11 // pred_check_branch
          %435 = sbr.rel (%p433) target = $region20
        $region19: #{tpu_custom_call.1} parent=11 // pred_region
          _
        $region20: #{tpu_custom_call.1} parent=11 // pred_fallthru
          _
        // Predicated region
        $region21: #{tpu_custom_call.1} parent=11 // pred_check
          %p436 = pneg %p156
        $region22: #{tpu_custom_call.1} parent=11 // pred_check_branch
          %438 = sbr.rel (%p436) target = $region24
        $region23: #{tpu_custom_call.1} parent=11 // pred_region
          _
        $region24: #{tpu_custom_call.1} parent=11 // pred_fallthru
          _
        // Predicated region
        $region25: #{tpu_custom_call.1} parent=11 // pred_check
          %p439 = pneg %p177
        $region26: #{tpu_custom_call.1} parent=11 // pred_check_branch
          %441 = sbr.rel (%p439) target = $region28
        $region27: #{tpu_custom_call.1} parent=11 // pred_region
          _
        $region28: #{tpu_custom_call.1} parent=11 // pred_fallthru
          _
        // Predicated region
        $region29: #{tpu_custom_call.1} parent=11 // pred_check
          %p442 = pneg %p198
        $region30: #{tpu_custom_call.1} parent=11 // pred_check_branch
          %444 = sbr.rel (%p442) target = $region32
        $region31: #{tpu_custom_call.1} parent=11 // pred_region
          %446 = vsyncadd [#allocation8], 0
          %s447 = sshll.u32 %s6, 4
          %s448 = int_to_ptr.hbm [resolvable:$true] %s447
          %s449 = sshll.u32 [#allocation7], 4
          %s450 = int_to_ptr.vmem [resolvable:$true] %s449
          %455 = dma.hbm_to_vmem [thread:$0]  %s448, 256, %s450, [#allocation8], 64, 64, 4
        $region32: #{tpu_custom_call.1} parent=11 // pred_fallthru
          _
        // Predicated region
        $region33: #{tpu_custom_call.1} parent=11 // pred_check
          %p456 = pneg %p219
        $region34: #{tpu_custom_call.1} parent=11 // pred_check_branch
          %458 = sbr.rel (%p456) target = $region36
        $region35: #{tpu_custom_call.1} parent=11 // pred_region
          _
        $region36: #{tpu_custom_call.1} parent=11 // pred_fallthru
          _
        // Predicated region
        $region37: #{tpu_custom_call.1} parent=11 // pred_check
          %p459 = pneg %p240
        $region38: #{tpu_custom_call.1} parent=11 // pred_check_branch
          %461 = sbr.rel (%p459) target = $region40
        $region39: #{tpu_custom_call.1} parent=11 // pred_region
          %463 = vsyncadd [#allocation11], 0
          %s464 = sshll.u32 %s8, 4
          %s465 = int_to_ptr.hbm [resolvable:$true] %s464
          %s466 = sshll.u32 [#allocation10], 4
          %s467 = int_to_ptr.vmem [resolvable:$true] %s466
          %472 = dma.hbm_to_vmem [thread:$0]  %s465, 256, %s467, [#allocation11], 64, 64, 4
        $region40: #{tpu_custom_call.1} parent=11 // pred_fallthru
          _
        // Predicated region
        $region41: #{tpu_custom_call.1} parent=11 // pred_check
          %p473 = pneg %p261
        $region42: #{tpu_custom_call.1} parent=11 // pred_check_branch
          %475 = sbr.rel (%p473) target = $region44
        $region43: #{tpu_custom_call.1} parent=11 // pred_region
          _
        $region44: #{tpu_custom_call.1} parent=11 // pred_fallthru
          _
        // Predicated region
        $region45: #{tpu_custom_call.1} parent=11 // pred_check
          %p476 = pneg %p282
        $region46: #{tpu_custom_call.1} parent=11 // pred_check_branch
          %478 = sbr.rel (%p476) target = $region48
        $region47: #{tpu_custom_call.1} parent=11 // pred_region
          _
        $region48: #{tpu_custom_call.1} parent=11 // pred_fallthru
          _
        // Predicated region
        $region49: #{tpu_custom_call.1} parent=11 // pred_check
          %p479 = pneg %p303
        $region50: #{tpu_custom_call.1} parent=11 // pred_check_branch
          %481 = sbr.rel (%p479) target = $region52
        $region51: #{tpu_custom_call.1} parent=11 // pred_region
          _
        $region52: #{tpu_custom_call.1} parent=11 // pred_fallthru
          _
        // Predicated region
        $region53: #{tpu_custom_call.1} parent=11 // pred_check
          %p482 = pneg %p324
        $region54: #{tpu_custom_call.1} parent=11 // pred_check_branch
          %484 = sbr.rel (%p482) target = $region56
        $region55: #{tpu_custom_call.1} parent=11 // pred_region
          %486 = vsyncadd [#allocation11], 0
          %s487 = sshll.u32 %s12, 4
          %s488 = int_to_ptr.hbm [resolvable:$true] %s487
          %s489 = sshll.u32 [#allocation12], 4
          %s490 = int_to_ptr.vmem [resolvable:$true] %s489
          %495 = dma.hbm_to_vmem [thread:$0]  %s488, 256, %s490, [#allocation11], 64, 64, 4
        $region56: #{tpu_custom_call.1} parent=11 // pred_fallthru
          _
        // Predicated region
        $region57: #{tpu_custom_call.1} parent=11 // pred_check
          %p496 = pneg %p345
        $region58: #{tpu_custom_call.1} parent=11 // pred_check_branch
          %498 = sbr.rel (%p496) target = $region60
        $region59: #{tpu_custom_call.1} parent=11 // pred_region
          _
        $region60: #{tpu_custom_call.1} parent=11 // pred_fallthru
          _
        // Predicated region
        $region61: #{tpu_custom_call.1} parent=11 // pred_check
          %p499 = pneg %p366
        $region62: #{tpu_custom_call.1} parent=11 // pred_check_branch
          %501 = sbr.rel (%p499) target = $region64
        $region63: #{tpu_custom_call.1} parent=11 // pred_region
          _
        $region64: #{tpu_custom_call.1} parent=11 // pred_fallthru
          _
        // Predicated region
        $region65: #{tpu_custom_call.1} parent=11 // pred_check
          %p502 = pneg %p387
        $region66: #{tpu_custom_call.1} parent=11 // pred_check_branch
          %504 = sbr.rel (%p502) target = $region68
        $region67: #{tpu_custom_call.1} parent=11 // pred_region
          _
        $region68: #{tpu_custom_call.1} parent=11 // pred_fallthru
          _
      $region12: #{tpu_custom_call.1} parent=5 // pred_fallthru
        _
      %p505 = scmp.lt.s32.totalorder %s27, 4
      // Predicated region
      $region69: #{tpu_custom_call.1} parent=5 // pred_check
        %p506 = pneg %p505
      $region70: #{tpu_custom_call.1} parent=5 // pred_check_branch
        %508 = sbr.rel (%p506) target = $region72
      $region71: #{tpu_custom_call.1} parent=5 // pred_region
        // Predicated region
        $region73: #{tpu_custom_call.1} parent=71 // pred_check
          %p509 = pneg %p61
        $region74: #{tpu_custom_call.1} parent=71 // pred_check_branch
          %511 = sbr.rel (%p509) target = $region76
        $region75: #{tpu_custom_call.1} parent=71 // pred_region
          %p512 = scmp.lt.s32.totalorder %s34, 1
          %s513 = scalar_select %p512, %s34, 1
          %p514 = scmp.lt.s32.totalorder %s35, 1
          %s515 = scalar_select %p514, %s35, 1
          %s516 = smul.addr %s513, 2
          %s517 = sadd.s32 %s515, %s516
          %s518 = smul.addr %s517, 8
          %s519 = scalar_lea.vmem %s0, %s518
        $region76: #{tpu_custom_call.1} parent=71 // pred_fallthru
          _
        // Predicated region
        $region77: #{tpu_custom_call.1} parent=71 // pred_check
          %p520 = pneg %p87
        $region78: #{tpu_custom_call.1} parent=71 // pred_check_branch
          %522 = sbr.rel (%p520) target = $region80
        $region79: #{tpu_custom_call.1} parent=71 // pred_region
          %p523 = scmp.lt.s32.totalorder %s34, 1
          %s524 = scalar_select %p523, %s34, 1
          %s525 = smul.addr %s524, 2
          %s526 = smul.addr %s525, 8
          %s527 = scalar_lea.vmem %s1, %s526
        $region80: #{tpu_custom_call.1} parent=71 // pred_fallthru
          _
      $region72: #{tpu_custom_call.1} parent=5 // pred_fallthru
        _
      %p528 = scmp.le.s32.totalorder 1, %s27
      %p529 = scmp.lt.s32.totalorder %s27, 5
      %p530 = pnand %p528, %p529
      %p531 = pneg %p530
      // Predicated region
      $region81: #{tpu_custom_call.1} parent=5 // pred_check
        _
      $region82: #{tpu_custom_call.1} parent=5 // pred_check_branch
        %533 = sbr.rel (%p530) target = $region84
      $region83: #{tpu_custom_call.1} parent=5 // pred_region
        %s534 = ssub.s32 %s27, 1
        // Predicated region
        $region85: #{tpu_custom_call.1} parent=83 // pred_check
          %p535 = pneg %p198
        $region86: #{tpu_custom_call.1} parent=83 // pred_check_branch
          %537 = sbr.rel (%p535) target = $region88
        $region87: #{tpu_custom_call.1} parent=83 // pred_region
          %539 = dma.done [#allocation8], 256
        $region88: #{tpu_custom_call.1} parent=83 // pred_fallthru
          _
        // Predicated region
        $region89: #{tpu_custom_call.1} parent=83 // pred_check
          %p540 = pneg %p240
        $region90: #{tpu_custom_call.1} parent=83 // pred_check_branch
          %542 = sbr.rel (%p540) target = $region92
        $region91: #{tpu_custom_call.1} parent=83 // pred_region
          %544 = dma.done [#allocation11], 256
        $region92: #{tpu_custom_call.1} parent=83 // pred_fallthru
          _
        // Predicated region
        $region93: #{tpu_custom_call.1} parent=83 // pred_check
          %p545 = pneg %p324
        $region94: #{tpu_custom_call.1} parent=83 // pred_check_branch
          %547 = sbr.rel (%p545) target = $region96
        $region95: #{tpu_custom_call.1} parent=83 // pred_region
          %549 = dma.done [#allocation11], 256
        $region96: #{tpu_custom_call.1} parent=83 // pred_fallthru
          _
        %p550 = scmp.lt.s32.totalorder %s36, 1
        %s551 = scalar_select %p550, %s36, 1
        %p552 = scmp.lt.s32.totalorder %s37, 1
        %s553 = scalar_select %p552, %s37, 1
        %s554 = smul.addr %s551, 2
        %s555 = sadd.s32 %s553, %s554
        %s556 = smul.addr %s555, 8
        %s557 = scalar_lea.vmem %s0, %s556
        %p558 = pneg %p67
        %p559 = pneg %p64
        %p560 = scmp.lt.s32.totalorder %s36, 1
        %s561 = scalar_select %p560, %s36, 1
        %s562 = smul.addr %s561, 2
        %s563 = smul.addr %s562, 8
        %s564 = scalar_lea.vmem %s1, %s563
        %p565 = pneg %p93
        %p566 = pneg %p90
        %p567 = pneg %p114
        %p568 = pneg %p111
        %p569 = pneg %p135
        %p570 = pneg %p132
        %p571 = pneg %p156
        %p572 = pneg %p153
        %p573 = pneg %p177
        %p574 = pneg %p174
        %p575 = pneg %p198
        %p576 = pneg %p195
        %p577 = pneg %p219
        %p578 = pneg %p216
        %p579 = pneg %p240
        %p580 = pneg %p237
        %p581 = pneg %p261
        %p582 = pneg %p258
        %p583 = pneg %p282
        %p584 = pneg %p279
        %p585 = pneg %p303
        %p586 = pneg %p300
        %p587 = pneg %p324
        %p588 = pneg %p321
        %p589 = pneg %p345
        %p590 = pneg %p342
        %p591 = pneg %p366
        %p592 = pneg %p363
        %p593 = pneg %p387
        %p594 = pneg %p384
        %p595 = pneg %p415
        %p596 = pneg %p412
        %s597 = sand.u32 %s402, 1
        %s598 = scalar_lea.sflag [#allocation9], %s597
        %s599 = sand.u32 %s402, 1
        %s600 = smul.addr %s599, 8
        %s601 = scalar_lea.vmem [#allocation13], %s600
        %p602 = scmp.lt.s32.totalorder %s36, 1
        %s603 = scalar_select %p602, %s36, 1
        %p604 = scmp.lt.s32.totalorder %s37, 1
        %s605 = scalar_select %p604, %s37, 1
        %s606 = smul.addr %s603, 2
        %s607 = sadd.s32 %s605, %s606
        %s608 = smul.addr %s607, 8
        %s609 = scalar_lea.vmem %s0, %s608
        %p610 = scmp.lt.s32.totalorder %s36, 1
        %s611 = scalar_select %p610, %s36, 1
        %s612 = smul.addr %s611, 2
        %s613 = smul.addr %s612, 8
        %s614 = scalar_lea.vmem %s1, %s613
        %p616 = scmp.eq.s32.totalorder %s37, 0
        // Predicated region
        $region97: #{tpu_custom_call.1} parent=83 // pred_check
          %p617 = pneg %p616
        $region98: #{tpu_custom_call.1} parent=83 // pred_check_branch
          %619 = sbr.rel (%p617) target = $region100
        $region99: #{tpu_custom_call.1} parent=83 // pred_region
          %v620 = vld [vmem:[%s614] sm:$0xff]
          %v621 = vld [vmem:[%s614 + $0x8] sm:$0xff]
          %v622 = vld [vmem:[%s2] sm:$0x1]
          %v623 = vld [vmem:[%s3] sm:$0x1]
          %vm624 = vcmask 261120
          %v625 = vsel %vm624, %v620, 0.0
          %626 = vadd.xlane.f32.xlu0 %v625
          %v627 = vpop.xlane.xlu0 %626
          %v628 = vsel %vm624, %v621, 0.0
          %629 = vadd.xlane.f32.xlu0 %v628
          %v630 = vpop.xlane.xlu0 %629
          %v631 = vrcp.pop 32.0
          %v632 = vmul.f32 32.0, %v631
          %v633 = vsub.f32 1.0, %v632
          %v634 = vmul.f32 %v631, %v633
          %v635 = vadd.f32 %v631, %v634
          %vm636 = vweird.f32 %v631
          %v637 = vsel %vm636, %v631, %v635
          %v638 = vmul.f32 %v627, %v637
          %v639 = vmul.f32 %v630, %v637
          %v640 = vsub.f32 %v620, %v638
          %v641 = vsub.f32 %v621, %v639
          %v642 = vmul.f32 %v640, %v640
          %v643 = vmul.f32 %v641, %v641
          %v644 = vsel %vm624, %v642, 0.0
          %645 = vadd.xlane.f32.xlu0 %v644
          %v646 = vpop.xlane.xlu0 %645
          %v647 = vsel %vm624, %v643, 0.0
          %648 = vadd.xlane.f32.xlu0 %v647
          %v649 = vpop.xlane.xlu0 %648
          %v650 = vmul.f32 %v646, %v637
          %v651 = vmul.f32 %v649, %v637
          %v652 = vadd.f32 %v650, 1e-05
          %v653 = vadd.f32 %v651, 1e-05
          %v654 = vrsqrt.pop %v652
          %v655 = vmul.f32 %v654, %v652
          %v656 = vmul.f32 %v655, %v654
          %v657 = vmul.f32 0.5, %v656
          %v658 = vsub.f32 1.5, %v657
          %v659 = vmul.f32 %v654, %v658
          %vm660 = vweird.f32 %v652
          %vm661 = vweird.f32 %v654
          %vm662 = vmor %vm660, %vm661
          %v663 = vsel %vm662, %v654, %v659
          %v664 = vrsqrt.pop %v653
          %v665 = vmul.f32 %v664, %v653
          %v666 = vmul.f32 %v665, %v664
          %v667 = vmul.f32 0.5, %v666
          %v668 = vsub.f32 1.5, %v667
          %v669 = vmul.f32 %v664, %v668
          %vm670 = vweird.f32 %v653
          %vm671 = vweird.f32 %v664
          %vm672 = vmor %vm670, %vm671
          %v673 = vsel %vm672, %v664, %v669
          %v674 = vmul.f32 %v640, %v663
          %v675 = vmul.f32 %v641, %v673
          %v677 = vperm.slane %v622, 0
          %v679 = vmul.f32 %v674, %v677
          %v680 = vmul.f32 %v675, %v677
          %v682 = vperm.slane %v623, 0
          %v684 = vadd.f32 %v679, %v682
          %v685 = vadd.f32 %v680, %v682
          %v686 = vpack.c.bf16 %v685, %v684
          %v687 = vld [vmem:[#allocation7] sm:$0xf]
          %v688 = vld [vmem:[#allocation7 + $0x4] sm:$0xf]
          %v689 = vld [vmem:[#allocation7 + $0x8] sm:$0xf]
          %v690 = vld [vmem:[#allocation7 + $0xc] sm:$0xf]
          %v691 = vld [vmem:[%s7] sm:$0x1]
          %v693 = vperm.slane %v691, 0
          %v699 = vunpack.c.l.b16 %v687
          %v700 = vunpack.c.l.b16 %v688
          %v701 = vunpack.c.l.b16 %v689
          %v702 = vunpack.c.l.b16 %v690
          %v703 = vpack.c.b16 %v700, %v699
          %v704 = vpack.c.b16 %v702, %v701
          %v708 = vsel %vm624, %v686, 0
          %710 = vmatpush.bf16.msra.mxu0 0
          %711 = vmatpush.bf16.msra.mxu0 0
          %712 = vmatpush.bf16.msra.mxu0 0
          %713 = vmatpush.bf16.msra.mxu0 0
          %714 = vmatpush.bf16.msra.mxu0 0
          %715 = vmatpush.bf16.msra.mxu0 0
          %716 = vmatpush.bf16.msra.mxu0 %v704
          %717 = vmatpush.bf16.msra.mxu0 %v703
          %718 = vmatmul.bf16.gmra.mxu0 %v708
          %v719 = vpop.f32.mrf.mxu0
          %v720 = vadd.f32 %v693, %v719
          %v721 = vpop.f32.mrf.mxu0
          %v722 = vadd.f32 %v693, %v721
          %723 = vdwg.mxu0
          %v724 = vpack.c.bf16 %v720, %v720
          %v725 = vpack.c.bf16 %v722, %v722
          %vm726 = vcmask 60416
          %727 = vst.msk [vmem:[#allocation2] sm:$0xf] %vm726, %v724
          %728 = vst.msk [vmem:[#allocation2 + $0x10] sm:$0xf] %vm726, %v725
          %731 = vrot.lane.b32.xlu0 %v724, 96
          %v732 = vpop.permute.xlu0 %731
          %733 = vrot.lane.b32.xlu0 %v725, 96
          %v734 = vpop.permute.xlu0 %733
          %737 = vst.msk [vmem:[#allocation3] sm:$0xf] %vm726, %v732
          %738 = vst.msk [vmem:[#allocation3 + $0x10] sm:$0xf] %vm726, %v734
          %739 = vrot.lane.b32.xlu0 %v724, 120
          %v740 = vpop.permute.xlu0 %739
          %741 = vrot.lane.b32.xlu0 %v725, 120
          %v742 = vpop.permute.xlu0 %741
          %s745 = scalar_lea.vmem [#allocation2], 4
          %746 = vst.msk [vmem:[%s745] sm:$0xf] %vm726, %v740
          %747 = vst.msk [vmem:[%s745 + $0x10] sm:$0xf] %vm726, %v742
          %748 = vrot.lane.b32.xlu0 %v724, 88
          %v749 = vpop.permute.xlu0 %748
          %750 = vrot.lane.b32.xlu0 %v725, 88
          %v751 = vpop.permute.xlu0 %750
          %s754 = scalar_lea.vmem [#allocation3], 4
          %755 = vst.msk [vmem:[%s754] sm:$0xf] %vm726, %v749
          %756 = vst.msk [vmem:[%s754 + $0x10] sm:$0xf] %vm726, %v751
          %757 = vrot.lane.b32.xlu0 %v724, 112
          %v758 = vpop.permute.xlu0 %757
          %759 = vrot.lane.b32.xlu0 %v725, 112
          %v760 = vpop.permute.xlu0 %759
          %s763 = scalar_lea.vmem [#allocation2], 8
          %764 = vst.msk [vmem:[%s763] sm:$0xf] %vm726, %v758
          %765 = vst.msk [vmem:[%s763 + $0x10] sm:$0xf] %vm726, %v760
          %766 = vrot.lane.b32.xlu0 %v724, 80
          %v767 = vpop.permute.xlu0 %766
          %768 = vrot.lane.b32.xlu0 %v725, 80
          %v769 = vpop.permute.xlu0 %768
          %s772 = scalar_lea.vmem [#allocation3], 8
          %773 = vst.msk [vmem:[%s772] sm:$0xf] %vm726, %v767
          %774 = vst.msk [vmem:[%s772 + $0x10] sm:$0xf] %vm726, %v769
          %775 = vrot.lane.b32.xlu0 %v724, 104
          %v776 = vpop.permute.xlu0 %775
          %777 = vrot.lane.b32.xlu0 %v725, 104
          %v778 = vpop.permute.xlu0 %777
          %s781 = scalar_lea.vmem [#allocation2], 12
          %782 = vst.msk [vmem:[%s781] sm:$0xf] %vm726, %v776
          %783 = vst.msk [vmem:[%s781 + $0x10] sm:$0xf] %vm726, %v778
          %784 = vrot.lane.b32.xlu0 %v724, 72
          %v785 = vpop.permute.xlu0 %784
          %786 = vrot.lane.b32.xlu0 %v725, 72
          %v787 = vpop.permute.xlu0 %786
          %s790 = scalar_lea.vmem [#allocation3], 12
          %791 = vst.msk [vmem:[%s790] sm:$0xf] %vm726, %v785
          %792 = vst.msk [vmem:[%s790 + $0x10] sm:$0xf] %vm726, %v787
        $region100: #{tpu_custom_call.1} parent=83 // pred_fallthru
          _
        %v793 = vld [vmem:[%s609] sm:$0xff]
        %v794 = vld [vmem:[%s2] sm:$0x1]
        %v795 = vld [vmem:[%s3] sm:$0x1]
        %vm796 = vcmask 261120
        %v797 = vsel %vm796, %v793, 0.0
        %798 = vadd.xlane.f32.xlu0 %v797
        %v799 = vpop.xlane.xlu0 %798
        %v800 = vrcp.pop 32.0
        %v801 = vmul.f32 32.0, %v800
        %v802 = vsub.f32 1.0, %v801
        %v803 = vmul.f32 %v800, %v802
        %v804 = vadd.f32 %v800, %v803
        %vm805 = vweird.f32 %v800
        %v806 = vsel %vm805, %v800, %v804
        %v807 = vmul.f32 %v799, %v806
        %v808 = vsub.f32 %v793, %v807
        %v809 = vmul.f32 %v808, %v808
        %v810 = vsel %vm796, %v809, 0.0
        %811 = vadd.xlane.f32.xlu0 %v810
        %v812 = vpop.xlane.xlu0 %811
        %v813 = vmul.f32 %v812, %v806
        %v814 = vadd.f32 %v813, 1e-05
        %v815 = vrsqrt.pop %v814
        %v816 = vmul.f32 %v815, %v814
        %v817 = vmul.f32 %v816, %v815
        %v818 = vmul.f32 0.5, %v817
        %v819 = vsub.f32 1.5, %v818
        %v820 = vmul.f32 %v815, %v819
        %vm821 = vweird.f32 %v814
        %vm822 = vweird.f32 %v815
        %vm823 = vmor %vm821, %vm822
        %v824 = vsel %vm823, %v815, %v820
        %v825 = vmul.f32 %v808, %v824
        %v827 = vperm.slane %v794, 0
        %v829 = vmul.f32 %v825, %v827
        %v831 = vperm.slane %v795, 0
        %v833 = vadd.f32 %v829, %v831
        %v834 = vpack.c.bf16 %v833, %v833
        %v835 = vld [vmem:[%s4] sm:$0xf]
        %v836 = vld [vmem:[%s4 + $0x4] sm:$0xf]
        %v837 = vld [vmem:[%s4 + $0x8] sm:$0xf]
        %v838 = vld [vmem:[%s4 + $0xc] sm:$0xf]
        %v839 = vld [vmem:[%s5] sm:$0x1]
        %v841 = vperm.slane %v839, 0
        %v847 = vunpack.c.l.b16 %v835
        %v848 = vunpack.c.l.b16 %v836
        %v849 = vunpack.c.l.b16 %v837
        %v850 = vunpack.c.l.b16 %v838
        %v851 = vpack.c.b16 %v848, %v847
        %v852 = vpack.c.b16 %v850, %v849
        %v856 = vsel %vm796, %v834, 0
        %858 = vmatpush.bf16.msra.mxu0 0
        %859 = vmatpush.bf16.msra.mxu0 0
        %860 = vmatpush.bf16.msra.mxu0 0
        %861 = vmatpush.bf16.msra.mxu0 0
        %862 = vmatpush.bf16.msra.mxu0 0
        %863 = vmatpush.bf16.msra.mxu0 0
        %864 = vmatpush.bf16.msra.mxu0 %v852
        %865 = vmatpush.bf16.msra.mxu0 %v851
        %866 = vmatmul.bf16.gmra.mxu0 %v856
        %v867 = vpop.f32.mrf.mxu0
        %v868 = vadd.f32 %v841, %v867
        %v869 = vpop.f32.mrf.mxu0
        %870 = vdwg.mxu0
        %872 = vrot.lane.b32.xlu0 %v868, 120
        %v873 = vpop.permute.xlu0 %872
        %875 = vrot.lane.b32.xlu0 %v868, 112
        %v876 = vpop.permute.xlu0 %875
        %878 = vrot.lane.b32.xlu0 %v868, 104
        %v879 = vpop.permute.xlu0 %878
        %v881 = vpack.c.bf16 %v868, %v868
        %v882 = vpack.c.bf16 %v873, %v873
        %v883 = vpack.c.bf16 %v876, %v876
        %v884 = vpack.c.bf16 %v879, %v879
        %vm885 = vcmask 7168
        %886 = vst.msk [vmem:[#allocation4] sm:$0xff] %vm885, -inf
        %887 = vst.msk [vmem:[#allocation4 + $0x8] sm:$0xff] %vm885, -inf
        %888 = vst.msk [vmem:[#allocation4 + $0x10] sm:$0xff] %vm885, -inf
        %889 = vst.msk [vmem:[#allocation4 + $0x18] sm:$0xff] %vm885, -inf
        %890 = vst.msk [vmem:[#allocation5] sm:$0xff] %vm885, 0.0
        %891 = vst.msk [vmem:[#allocation5 + $0x8] sm:$0xff] %vm885, 0.0
        %892 = vst.msk [vmem:[#allocation5 + $0x10] sm:$0xff] %vm885, 0.0
        %893 = vst.msk [vmem:[#allocation5 + $0x18] sm:$0xff] %vm885, 0.0
        %vm894 = vcmask 64512
        %895 = vst.msk [vmem:[#allocation6] sm:$0xff] %vm894, 0.0
        %896 = vst.msk [vmem:[#allocation6 + $0x8] sm:$0xff] %vm894, 0.0
        %897 = vst.msk [vmem:[#allocation6 + $0x10] sm:$0xff] %vm894, 0.0
        %898 = vst.msk [vmem:[#allocation6 + $0x18] sm:$0xff] %vm894, 0.0
        %s899 = smul.u32 %s37, 8
        %s900 = sadd.s32 %s37, 1
        // While loop
        $region101: #{tpu_custom_call.1} parent=83 // loop_pre_header
          _
        $region102: #{tpu_custom_call.1} parent=83 // loop_header
          %s902 = sphi 0, %s904
          %p903 = scmp.ge.s32.totalorder %s902, %s900
        $region103: #{tpu_custom_call.1} parent=83 // loop_header_branch
          %906 = sbr.rel (%p903) target = $region107
        $region104: #{tpu_custom_call.1} parent=83 // loop_body
          %s907 = smul.u32 %s902, 4
          %s908 = smul.addr %s907, 4
          %s909 = scalar_lea.vmem [#allocation2], %s908
          %v910 = vld [vmem:[%s909] sm:$0xf]
          %v911 = vld [vmem:[%s909 + $0x4] sm:$0xf]
          %v912 = vld [vmem:[%s909 + $0x8] sm:$0xf]
          %v913 = vld [vmem:[%s909 + $0xc] sm:$0xf]
          %s914 = smul.addr %s907, 4
          %s915 = scalar_lea.vmem [#allocation3], %s914
          %v916 = vld [vmem:[%s915] sm:$0xf]
          %v917 = vld [vmem:[%s915 + $0x4] sm:$0xf]
          %v918 = vld [vmem:[%s915 + $0x8] sm:$0xf]
          %v919 = vld [vmem:[%s915 + $0xc] sm:$0xf]
          %v921 = vsel %vm894, %v881, 0
          %v924 = vsel %vm894, %v910, 0
          %926 = vmatpush.bf16.xpose.msra.mxu0 0
          %927 = vmatpush.bf16.xpose.msra.mxu0 0
          %928 = vmatpush.bf16.xpose.msra.mxu0 0
          %929 = vmatpush.bf16.xpose.msra.mxu0 0
          %930 = vmatpush.bf16.xpose.msra.mxu0 0
          %931 = vmatpush.bf16.xpose.msra.mxu0 0
          %932 = vmatpush.bf16.xpose.msra.mxu0 0
          %933 = vmatpush.bf16.xpose.msra.mxu0 %v924
          %934 = vmatmul.bf16.gmra.mxu0 %v921
          %v935 = vpop.f32.mrf.mxu0
          %v936 = vadd.f32 0.0, %v935
          %v937 = vpop.f32.mrf.mxu0
          %938 = vdwg.mxu0
          %v940 = vsel %vm894, %v882, 0
          %v943 = vsel %vm894, %v911, 0
          %945 = vmatpush.bf16.xpose.msra.mxu0 0
          %946 = vmatpush.bf16.xpose.msra.mxu0 0
          %947 = vmatpush.bf16.xpose.msra.mxu0 0
          %948 = vmatpush.bf16.xpose.msra.mxu0 0
          %949 = vmatpush.bf16.xpose.msra.mxu0 0
          %950 = vmatpush.bf16.xpose.msra.mxu0 0
          %951 = vmatpush.bf16.xpose.msra.mxu0 0
          %952 = vmatpush.bf16.xpose.msra.mxu0 %v943
          %953 = vmatmul.bf16.gmra.mxu0 %v940
          %v954 = vpop.f32.mrf.mxu0
          %v955 = vadd.f32 0.0, %v954
          %v956 = vpop.f32.mrf.mxu0
          %957 = vdwg.mxu0
          %v959 = vsel %vm894, %v883, 0
          %v962 = vsel %vm894, %v912, 0
          %964 = vmatpush.bf16.xpose.msra.mxu0 0
          %965 = vmatpush.bf16.xpose.msra.mxu0 0
          %966 = vmatpush.bf16.xpose.msra.mxu0 0
          %967 = vmatpush.bf16.xpose.msra.mxu0 0
          %968 = vmatpush.bf16.xpose.msra.mxu0 0
          %969 = vmatpush.bf16.xpose.msra.mxu0 0
          %970 = vmatpush.bf16.xpose.msra.mxu0 0
          %971 = vmatpush.bf16.xpose.msra.mxu0 %v962
          %972 = vmatmul.bf16.gmra.mxu0 %v959
          %v973 = vpop.f32.mrf.mxu0
          %v974 = vadd.f32 0.0, %v973
          %v975 = vpop.f32.mrf.mxu0
          %976 = vdwg.mxu0
          %v978 = vsel %vm894, %v884, 0
          %v981 = vsel %vm894, %v913, 0
          %983 = vmatpush.bf16.xpose.msra.mxu0 0
          %984 = vmatpush.bf16.xpose.msra.mxu0 0
          %985 = vmatpush.bf16.xpose.msra.mxu0 0
          %986 = vmatpush.bf16.xpose.msra.mxu0 0
          %987 = vmatpush.bf16.xpose.msra.mxu0 0
          %988 = vmatpush.bf16.xpose.msra.mxu0 0
          %989 = vmatpush.bf16.xpose.msra.mxu0 0
          %990 = vmatpush.bf16.xpose.msra.mxu0 %v981
          %991 = vmatmul.bf16.gmra.mxu0 %v978
          %v992 = vpop.f32.mrf.mxu0
          %v993 = vadd.f32 0.0, %v992
          %v994 = vpop.f32.mrf.mxu0
          %995 = vdwg.mxu0
          %v996 = vlaneseq
          %v997 = vshrl.u32 %v996, 7
          %v998 = vstv %s899
          %v999 = vadd.s32 %v997, %v998
          %v1000 = vlaneseq
          %v1001 = vand.u32 %v1000, 127
          %s1002 = smul.u32 %s902, 8
          %v1003 = vstv %s1002
          %v1004 = vadd.s32 %v1001, %v1003
          %vm1005 = vcmp.ge.s32.totalorder %v999, %v1004
          %v1006 = vsel %vm1005, 1, 0
          %vm1007 = vcmp.eq.s32.totalorder %v1006, 1
          %v1008 = vsel %vm1007, %v936, -inf
          %v1009 = vsel %vm1007, %v955, -inf
          %v1010 = vsel %vm1007, %v974, -inf
          %v1011 = vsel %vm1007, %v993, -inf
          %v1012 = vld [vmem:[#allocation4] sm:$0xff]
          %v1013 = vld [vmem:[#allocation4 + $0x8] sm:$0xff]
          %v1014 = vld [vmem:[#allocation4 + $0x10] sm:$0xff]
          %v1015 = vld [vmem:[#allocation4 + $0x18] sm:$0xff]
          %v1016 = vsel %vm894, %v1008, -inf
          %1017 = vmax.xlane.f32.xlu0 %v1016
          %v1018 = vpop.xlane.xlu0 %1017
          %v1019 = vsel %vm894, %v1009, -inf
          %1020 = vmax.xlane.f32.xlu0 %v1019
          %v1021 = vpop.xlane.xlu0 %1020
          %v1022 = vsel %vm894, %v1010, -inf
          %1023 = vmax.xlane.f32.xlu0 %v1022
          %v1024 = vpop.xlane.xlu0 %1023
          %v1025 = vsel %vm894, %v1011, -inf
          %1026 = vmax.xlane.f32.xlu0 %v1025
          %v1027 = vpop.xlane.xlu0 %1026
          %v1028 = vmax.f32 %v1012, %v1018
          %v1029 = vmax.f32 %v1013, %v1021
          %v1030 = vmax.f32 %v1014, %v1024
          %v1031 = vmax.f32 %v1015, %v1027
          %v1032 = vsub.f32 %v1012, %v1028
          %v1033 = vsub.f32 %v1013, %v1029
          %v1034 = vsub.f32 %v1014, %v1030
          %v1035 = vsub.f32 %v1015, %v1031
          %v1036 = vmul.f32 %v1032, 1.442695
          %v1037 = vpow.pop %v1036
          %v1038 = vmul.f32 %v1033, 1.442695
          %v1039 = vpow.pop %v1038
          %v1040 = vmul.f32 %v1034, 1.442695
          %v1041 = vpow.pop %v1040
          %v1042 = vmul.f32 %v1035, 1.442695
          %v1043 = vpow.pop %v1042
          %1045 = vset.pattern.permute.xlu0 0
          %1046 = vperm.xlu0 %1045, %v1028
          %v1047 = vpop.permute.xlu0 %1046
          %1050 = vset.pattern.permute.xlu0 0
          %1051 = vperm.xlu0 %1050, %v1029
          %v1052 = vpop.permute.xlu0 %1051
          %1055 = vset.pattern.permute.xlu0 0
          %1056 = vperm.xlu0 %1055, %v1030
          %v1057 = vpop.permute.xlu0 %1056
          %1060 = vset.pattern.permute.xlu0 0
          %1061 = vperm.xlu0 %1060, %v1031
          %v1062 = vpop.permute.xlu0 %1061
          %v1064 = vsub.f32 %v1008, %v1047
          %v1065 = vsub.f32 %v1009, %v1052
          %v1066 = vsub.f32 %v1010, %v1057
          %v1067 = vsub.f32 %v1011, %v1062
          %v1068 = vmul.f32 %v1064, 1.442695
          %v1069 = vpow.pop %v1068
          %v1070 = vmul.f32 %v1065, 1.442695
          %v1071 = vpow.pop %v1070
          %v1072 = vmul.f32 %v1066, 1.442695
          %v1073 = vpow.pop %v1072
          %v1074 = vmul.f32 %v1067, 1.442695
          %v1075 = vpow.pop %v1074
          %v1076 = vld [vmem:[#allocation5] sm:$0xff]
          %v1077 = vld [vmem:[#allocation5 + $0x8] sm:$0xff]
          %v1078 = vld [vmem:[#allocation5 + $0x10] sm:$0xff]
          %v1079 = vld [vmem:[#allocation5 + $0x18] sm:$0xff]
          %v1080 = vmul.f32 %v1037, %v1076
          %v1081 = vmul.f32 %v1039, %v1077
          %v1082 = vmul.f32 %v1041, %v1078
          %v1083 = vmul.f32 %v1043, %v1079
          %v1084 = vsel %vm894, %v1069, 0.0
          %1085 = vadd.xlane.f32.xlu0 %v1084
          %v1086 = vpop.xlane.xlu0 %1085
          %v1087 = vsel %vm894, %v1071, 0.0
          %1088 = vadd.xlane.f32.xlu0 %v1087
          %v1089 = vpop.xlane.xlu0 %1088
          %v1090 = vsel %vm894, %v1073, 0.0
          %1091 = vadd.xlane.f32.xlu0 %v1090
          %v1092 = vpop.xlane.xlu0 %1091
          %v1093 = vsel %vm894, %v1075, 0.0
          %1094 = vadd.xlane.f32.xlu0 %v1093
          %v1095 = vpop.xlane.xlu0 %1094
          %v1096 = vadd.f32 %v1080, %v1086
          %v1097 = vadd.f32 %v1081, %v1089
          %v1098 = vadd.f32 %v1082, %v1092
          %v1099 = vadd.f32 %v1083, %v1095
          %1100 = vst.msk [vmem:[#allocation5] sm:$0xff] %vm885, %v1096
          %1101 = vst.msk [vmem:[#allocation5 + $0x8] sm:$0xff] %vm885, %v1097
          %1102 = vst.msk [vmem:[#allocation5 + $0x10] sm:$0xff] %vm885, %v1098
          %1103 = vst.msk [vmem:[#allocation5 + $0x18] sm:$0xff] %vm885, %v1099
          %v1104 = vld [vmem:[#allocation6] sm:$0xff]
          %v1105 = vld [vmem:[#allocation6 + $0x8] sm:$0xff]
          %v1106 = vld [vmem:[#allocation6 + $0x10] sm:$0xff]
          %v1107 = vld [vmem:[#allocation6 + $0x18] sm:$0xff]
          %1109 = vset.pattern.permute.xlu0 0
          %1110 = vperm.xlu0 %1109, %v1037
          %v1111 = vpop.permute.xlu0 %1110
          %1114 = vset.pattern.permute.xlu0 0
          %1115 = vperm.xlu0 %1114, %v1039
          %v1116 = vpop.permute.xlu0 %1115
          %1119 = vset.pattern.permute.xlu0 0
          %1120 = vperm.xlu0 %1119, %v1041
          %v1121 = vpop.permute.xlu0 %1120
          %1124 = vset.pattern.permute.xlu0 0
          %1125 = vperm.xlu0 %1124, %v1043
          %v1126 = vpop.permute.xlu0 %1125
          %v1128 = vmul.f32 %v1111, %v1104
          %v1129 = vmul.f32 %v1116, %v1105
          %v1130 = vmul.f32 %v1121, %v1106
          %v1131 = vmul.f32 %v1126, %v1107
          %v1132 = vpack.c.bf16 %v1069, %v1069
          %v1133 = vpack.c.bf16 %v1071, %v1071
          %v1134 = vpack.c.bf16 %v1073, %v1073
          %v1135 = vpack.c.bf16 %v1075, %v1075
          %v1137 = vsel %vm894, %v1132, 0
          %vm1139 = vcmask 1043456
          %v1141 = vsel %vm1139, %v916, 0
          %1143 = vmatpush.bf16.msra.mxu0 0
          %1144 = vmatpush.bf16.msra.mxu0 0
          %1145 = vmatpush.bf16.msra.mxu0 0
          %1146 = vmatpush.bf16.msra.mxu0 0
          %1147 = vmatpush.bf16.msra.mxu0 0
          %1148 = vmatpush.bf16.msra.mxu0 0
          %1149 = vmatpush.bf16.msra.mxu0 0
          %1150 = vmatpush.bf16.msra.mxu0 %v1141
          %1151 = vmatmul.bf16.gmra.mxu0 %v1137
          %v1152 = vpop.f32.mrf.mxu0
          %v1153 = vadd.f32 0.0, %v1152
          %v1154 = vpop.f32.mrf.mxu0
          %1155 = vdwg.mxu0
          %v1157 = vsel %vm894, %v1133, 0
          %v1160 = vsel %vm1139, %v917, 0
          %1162 = vmatpush.bf16.msra.mxu0 0
          %1163 = vmatpush.bf16.msra.mxu0 0
          %1164 = vmatpush.bf16.msra.mxu0 0
          %1165 = vmatpush.bf16.msra.mxu0 0
          %1166 = vmatpush.bf16.msra.mxu0 0
          %1167 = vmatpush.bf16.msra.mxu0 0
          %1168 = vmatpush.bf16.msra.mxu0 0
          %1169 = vmatpush.bf16.msra.mxu0 %v1160
          %1170 = vmatmul.bf16.gmra.mxu0 %v1157
          %v1171 = vpop.f32.mrf.mxu0
          %v1172 = vadd.f32 0.0, %v1171
          %v1173 = vpop.f32.mrf.mxu0
          %1174 = vdwg.mxu0
          %v1176 = vsel %vm894, %v1134, 0
          %v1179 = vsel %vm1139, %v918, 0
          %1181 = vmatpush.bf16.msra.mxu0 0
          %1182 = vmatpush.bf16.msra.mxu0 0
          %1183 = vmatpush.bf16.msra.mxu0 0
          %1184 = vmatpush.bf16.msra.mxu0 0
          %1185 = vmatpush.bf16.msra.mxu0 0
          %1186 = vmatpush.bf16.msra.mxu0 0
          %1187 = vmatpush.bf16.msra.mxu0 0
          %1188 = vmatpush.bf16.msra.mxu0 %v1179
          %1189 = vmatmul.bf16.gmra.mxu0 %v1176
          %v1190 = vpop.f32.mrf.mxu0
          %v1191 = vadd.f32 0.0, %v1190
          %v1192 = vpop.f32.mrf.mxu0
          %1193 = vdwg.mxu0
          %v1195 = vsel %vm894, %v1135, 0
          %v1198 = vsel %vm1139, %v919, 0
          %1200 = vmatpush.bf16.msra.mxu0 0
          %1201 = vmatpush.bf16.msra.mxu0 0
          %1202 = vmatpush.bf16.msra.mxu0 0
          %1203 = vmatpush.bf16.msra.mxu0 0
          %1204 = vmatpush.bf16.msra.mxu0 0
          %1205 = vmatpush.bf16.msra.mxu0 0
          %1206 = vmatpush.bf16.msra.mxu0 0
          %1207 = vmatpush.bf16.msra.mxu0 %v1198
          %1208 = vmatmul.bf16.gmra.mxu0 %v1195
          %v1209 = vpop.f32.mrf.mxu0
          %v1210 = vadd.f32 0.0, %v1209
          %v1211 = vpop.f32.mrf.mxu0
          %1212 = vdwg.mxu0
          %v1213 = vadd.f32 %v1128, %v1153
          %v1214 = vadd.f32 %v1129, %v1172
          %v1215 = vadd.f32 %v1130, %v1191
          %v1216 = vadd.f32 %v1131, %v1210
          %1217 = vst.msk [vmem:[#allocation6] sm:$0xff] %vm894, %v1213
          %1218 = vst.msk [vmem:[#allocation6 + $0x8] sm:$0xff] %vm894, %v1214
          %1219 = vst.msk [vmem:[#allocation6 + $0x10] sm:$0xff] %vm894, %v1215
          %1220 = vst.msk [vmem:[#allocation6 + $0x18] sm:$0xff] %vm894, %v1216
          %1221 = vst.msk [vmem:[#allocation4] sm:$0xff] %vm885, %v1028
          %1222 = vst.msk [vmem:[#allocation4 + $0x8] sm:$0xff] %vm885, %v1029
          %1223 = vst.msk [vmem:[#allocation4 + $0x10] sm:$0xff] %vm885, %v1030
          %1224 = vst.msk [vmem:[#allocation4 + $0x18] sm:$0xff] %vm885, %v1031
        $region105: #{tpu_custom_call.1} parent=83 // loop_footer
          %s904 = sadd.s32 %s902, 1
        $region106: #{tpu_custom_call.1} parent=83 // loop_footer_branch
          %901 = sbr.rel target = $region102
        $region107: #{tpu_custom_call.1} parent=83 // loop_exit
          _
        %v1225 = vld [vmem:[#allocation6] sm:$0xff]
        %v1226 = vld [vmem:[#allocation6 + $0x8] sm:$0xff]
        %v1227 = vld [vmem:[#allocation6 + $0x10] sm:$0xff]
        %v1228 = vld [vmem:[#allocation6 + $0x18] sm:$0xff]
        %v1229 = vld [vmem:[#allocation5] sm:$0xff]
        %v1230 = vld [vmem:[#allocation5 + $0x8] sm:$0xff]
        %v1231 = vld [vmem:[#allocation5 + $0x10] sm:$0xff]
        %v1232 = vld [vmem:[#allocation5 + $0x18] sm:$0xff]
        %v1233 = vrcp.pop %v1229
        %v1234 = vrcp.pop %v1230
        %v1235 = vrcp.pop %v1231
        %v1236 = vrcp.pop %v1232
        %1238 = vset.pattern.permute.xlu0 0
        %1239 = vperm.xlu0 %1238, %v1233
        %v1240 = vpop.permute.xlu0 %1239
        %1243 = vset.pattern.permute.xlu0 0
        %1244 = vperm.xlu0 %1243, %v1234
        %v1245 = vpop.permute.xlu0 %1244
        %1248 = vset.pattern.permute.xlu0 0
        %1249 = vperm.xlu0 %1248, %v1235
        %v1250 = vpop.permute.xlu0 %1249
        %1253 = vset.pattern.permute.xlu0 0
        %1254 = vperm.xlu0 %1253, %v1236
        %v1255 = vpop.permute.xlu0 %1254
        %v1257 = vmul.f32 %v1225, %v1240
        %v1258 = vmul.f32 %v1226, %v1245
        %v1259 = vmul.f32 %v1227, %v1250
        %v1260 = vmul.f32 %v1228, %v1255
        %1262 = vrot.lane.b32.xlu0 %v1258, 8
        %v1263 = vpop.permute.xlu0 %1262
        %1266 = vrot.lane.b32.xlu0 %v1259, 16
        %v1267 = vpop.permute.xlu0 %1266
        %1270 = vrot.lane.b32.xlu0 %v1260, 24
        %v1271 = vpop.permute.xlu0 %1270
        %v1273 = vsel %vm894, %v1257, %v1263
        %vm1274 = vcmask 130048
        %v1275 = vsel %vm1274, %v1273, %v1267
        %vm1276 = vcmask 195584
        %v1277 = vsel %vm1276, %v1275, %v1271
        %v1278 = vpack.c.bf16 %v1277, %v1277
        %v1279 = vld [vmem:[#allocation10] sm:$0xf]
        %v1280 = vld [vmem:[#allocation10 + $0x4] sm:$0xf]
        %v1281 = vld [vmem:[#allocation10 + $0x8] sm:$0xf]
        %v1282 = vld [vmem:[#allocation10 + $0xc] sm:$0xf]
        %v1283 = vld [vmem:[%s9] sm:$0x1]
        %v1285 = vperm.slane %v1283, 0
        %v1291 = vunpack.c.l.b16 %v1279
        %v1292 = vunpack.c.l.b16 %v1280
        %v1293 = vunpack.c.l.b16 %v1281
        %v1294 = vunpack.c.l.b16 %v1282
        %v1295 = vpack.c.b16 %v1292, %v1291
        %v1296 = vpack.c.b16 %v1294, %v1293
        %v1300 = vsel %vm796, %v1278, 0
        %1302 = vmatpush.bf16.msra.mxu0 0
        %1303 = vmatpush.bf16.msra.mxu0 0
        %1304 = vmatpush.bf16.msra.mxu0 0
        %1305 = vmatpush.bf16.msra.mxu0 0
        %1306 = vmatpush.bf16.msra.mxu0 0
        %1307 = vmatpush.bf16.msra.mxu0 0
        %1308 = vmatpush.bf16.msra.mxu0 %v1296
        %1309 = vmatpush.bf16.msra.mxu0 %v1295
        %1310 = vmatmul.bf16.gmra.mxu0 %v1300
        %v1311 = vpop.f32.mrf.mxu0
        %v1312 = vadd.f32 %v1285, %v1311
        %v1313 = vpop.f32.mrf.mxu0
        %1314 = vdwg.mxu0
        %v1315 = vadd.f32 %v793, %v1312
        %v1316 = vld [vmem:[%s10] sm:$0x1]
        %v1317 = vld [vmem:[%s11] sm:$0x1]
        %v1318 = vsel %vm796, %v1315, 0.0
        %1319 = vadd.xlane.f32.xlu0 %v1318
        %v1320 = vpop.xlane.xlu0 %1319
        %v1321 = vmul.f32 %v1320, %v806
        %v1322 = vsub.f32 %v1315, %v1321
        %v1323 = vmul.f32 %v1322, %v1322
        %v1324 = vsel %vm796, %v1323, 0.0
        %1325 = vadd.xlane.f32.xlu0 %v1324
        %v1326 = vpop.xlane.xlu0 %1325
        %v1327 = vmul.f32 %v1326, %v806
        %v1328 = vadd.f32 %v1327, 1e-05
        %v1329 = vrsqrt.pop %v1328
        %v1330 = vmul.f32 %v1329, %v1328
        %v1331 = vmul.f32 %v1330, %v1329
        %v1332 = vmul.f32 0.5, %v1331
        %v1333 = vsub.f32 1.5, %v1332
        %v1334 = vmul.f32 %v1329, %v1333
        %vm1335 = vweird.f32 %v1328
        %vm1336 = vweird.f32 %v1329
        %vm1337 = vmor %vm1335, %vm1336
        %v1338 = vsel %vm1337, %v1329, %v1334
        %v1339 = vmul.f32 %v1322, %v1338
        %v1341 = vperm.slane %v1316, 0
        %v1343 = vmul.f32 %v1339, %v1341
        %v1345 = vperm.slane %v1317, 0
        %v1347 = vadd.f32 %v1343, %v1345
        %v1348 = vpack.c.bf16 %v1347, %v1347
        %v1349 = vld [vmem:[#allocation12] sm:$0xf]
        %v1350 = vld [vmem:[#allocation12 + $0x4] sm:$0xf]
        %v1351 = vld [vmem:[#allocation12 + $0x8] sm:$0xf]
        %v1352 = vld [vmem:[#allocation12 + $0xc] sm:$0xf]
        %v1353 = vld [vmem:[%s13] sm:$0x1]
        %v1355 = vperm.slane %v1353, 0
        %v1361 = vunpack.c.l.b16 %v1349
        %v1362 = vunpack.c.l.b16 %v1350
        %v1363 = vunpack.c.l.b16 %v1351
        %v1364 = vunpack.c.l.b16 %v1352
        %v1365 = vpack.c.b16 %v1362, %v1361
        %v1366 = vpack.c.b16 %v1364, %v1363
        %v1370 = vsel %vm796, %v1348, 0
        %1372 = vmatpush.bf16.msra.mxu0 0
        %1373 = vmatpush.bf16.msra.mxu0 0
        %1374 = vmatpush.bf16.msra.mxu0 0
        %1375 = vmatpush.bf16.msra.mxu0 0
        %1376 = vmatpush.bf16.msra.mxu0 0
        %1377 = vmatpush.bf16.msra.mxu0 0
        %1378 = vmatpush.bf16.msra.mxu0 %v1366
        %1379 = vmatpush.bf16.msra.mxu0 %v1365
        %1380 = vmatmul.bf16.gmra.mxu0 %v1370
        %v1381 = vpop.f32.mrf.mxu0
        %v1382 = vadd.f32 %v1355, %v1381
        %v1383 = vpop.f32.mrf.mxu0
        %1384 = vdwg.mxu0
        %v1385 = vmul.f32 %v1382, 0.5
        %v1386 = vmul.f32 %v1382, 0.70710677
        %v1387 = vmul.f32 %v1386, %v1386
        %v1388 = vmin.f32 16.0, %v1387
        %v1389 = vmul.f32 %v1388, 2.1237322e-06
        %v1390 = vadd.f32 %v1389, 0.00028619796
        %v1391 = vmul.f32 %v1388, %v1390
        %v1392 = vadd.f32 %v1391, 0.0036580483
        %v1393 = vmul.f32 %v1388, %v1392
        %v1394 = vadd.f32 %v1393, 0.05243302
        %v1395 = vmul.f32 %v1388, %v1394
        %v1396 = vadd.f32 %v1395, 0.18741608
        %v1397 = vmul.f32 %v1388, %v1396
        %v1398 = vadd.f32 %v1397, 1.1283791
        %v1399 = vmul.f32 %v1386, %v1398
        %v1400 = vmul.f32 %v1388, 3.8918573e-05
        %v1401 = vadd.f32 %v1400, 0.001143296
        %v1402 = vmul.f32 %v1388, %v1401
        %v1403 = vadd.f32 %v1402, 0.014752088
        %v1404 = vmul.f32 %v1388, %v1403
        %v1405 = vadd.f32 %v1404, 0.112945676
        %v1406 = vmul.f32 %v1388, %v1405
        %v1407 = vadd.f32 %v1406, 0.4994258
        %v1408 = vmul.f32 %v1388, %v1407
        %v1409 = vadd.f32 %v1408, 1.0
        %v1410 = vrcp.pop %v1409
        %v1411 = vmul.f32 %v1409, %v1410
        %v1412 = vsub.f32 1.0, %v1411
        %v1413 = vmul.f32 %v1410, %v1412
        %v1414 = vadd.f32 %v1410, %v1413
        %vm1415 = vweird.f32 %v1409
        %vm1416 = vweird.f32 %v1410
        %vm1417 = vmor %vm1415, %vm1416
        %v1418 = vsel %vm1417, %v1410, %v1414
        %v1419 = vand.u32 2147483647, %v1409
        %vm1420 = vcmp.eq.f32.partialorder %v1419, 8.507059e+37
        %v1421 = vand.u32 %v1409, 2147483648
        %v1422 = vor.u32 1.1754944e-38, %v1421
        %v1423 = vsel %vm1420, %v1422, %v1418
        %v1424 = vmul.f32 %v1399, %v1423
        %v1425 = vmin.f32 %v1424, 1.0
        %v1426 = vmax.f32 %v1425, -1.0
        %v1427 = vadd.f32 %v1426, 1.0
        %v1428 = vmul.f32 %v1385, %v1427
        %v1429 = vpack.c.bf16 %v1428, %v1428
        %v1430 = vld [vmem:[%s14] sm:$0xf]
        %v1431 = vld [vmem:[%s14 + $0x4] sm:$0xf]
        %v1432 = vld [vmem:[%s14 + $0x8] sm:$0xf]
        %v1433 = vld [vmem:[%s14 + $0xc] sm:$0xf]
        %v1434 = vld [vmem:[%s14 + $0x10] sm:$0xf]
        %v1435 = vld [vmem:[%s14 + $0x14] sm:$0xf]
        %v1436 = vld [vmem:[%s14 + $0x18] sm:$0xf]
        %v1437 = vld [vmem:[%s14 + $0x1c] sm:$0xf]
        %v1438 = vld [vmem:[%s14 + $0x20] sm:$0xf]
        %v1439 = vld [vmem:[%s14 + $0x24] sm:$0xf]
        %v1440 = vld [vmem:[%s14 + $0x28] sm:$0xf]
        %v1441 = vld [vmem:[%s14 + $0x2c] sm:$0xf]
        %v1442 = vld [vmem:[%s14 + $0x30] sm:$0xf]
        %v1443 = vld [vmem:[%s14 + $0x34] sm:$0xf]
        %v1444 = vld [vmem:[%s14 + $0x38] sm:$0xf]
        %v1445 = vld [vmem:[%s14 + $0x3c] sm:$0xf]
        %v1446 = vld [vmem:[%s15] sm:$0x1]
        %v1448 = vperm.slane %v1446, 0
        %v1466 = vunpack.c.l.b16 %v1430
        %v1467 = vunpack.c.l.b16 %v1431
        %v1468 = vunpack.c.l.b16 %v1432
        %v1469 = vunpack.c.l.b16 %v1433
        %v1470 = vunpack.c.l.b16 %v1434
        %v1471 = vunpack.c.l.b16 %v1435
        %v1472 = vunpack.c.l.b16 %v1436
        %v1473 = vunpack.c.l.b16 %v1437
        %v1474 = vunpack.c.l.b16 %v1438
        %v1475 = vunpack.c.l.b16 %v1439
        %v1476 = vunpack.c.l.b16 %v1440
        %v1477 = vunpack.c.l.b16 %v1441
        %v1478 = vunpack.c.l.b16 %v1442
        %v1479 = vunpack.c.l.b16 %v1443
        %v1480 = vunpack.c.l.b16 %v1444
        %v1481 = vunpack.c.l.b16 %v1445
        %v1482 = vpack.c.b16 %v1467, %v1466
        %v1483 = vpack.c.b16 %v1469, %v1468
        %v1484 = vpack.c.b16 %v1471, %v1470
        %v1485 = vpack.c.b16 %v1473, %v1472
        %v1486 = vpack.c.b16 %v1475, %v1474
        %v1487 = vpack.c.b16 %v1477, %v1476
        %v1488 = vpack.c.b16 %v1479, %v1478
        %v1489 = vpack.c.b16 %v1481, %v1480
        %1498 = vmatpush.bf16.msra.mxu0 %v1489
        %1499 = vmatpush.bf16.msra.mxu0 %v1488
        %1500 = vmatpush.bf16.msra.mxu0 %v1487
        %1501 = vmatpush.bf16.msra.mxu0 %v1486
        %1502 = vmatpush.bf16.msra.mxu0 %v1485
        %1503 = vmatpush.bf16.msra.mxu0 %v1484
        %1504 = vmatpush.bf16.msra.mxu0 %v1483
        %1505 = vmatpush.bf16.msra.mxu0 %v1482
        %1506 = vmatmul.bf16.gmra.mxu0 %v1429
        %v1507 = vpop.f32.mrf.mxu0
        %v1508 = vadd.f32 %v1448, %v1507
        %v1509 = vpop.f32.mrf.mxu0
        %1510 = vdwg.mxu0
        %v1511 = vadd.f32 %v1315, %v1508
        %1512 = vst.msk [vmem:[%s601] sm:$0xff] %vm796, %v1511
        %s1513 = sand.u32 %s402, 1
        %s1514 = scalar_lea.sflag [#allocation9], %s1513
        %s1515 = sand.u32 %s402, 1
        %s1516 = smul.addr %s1515, 8
        %s1517 = scalar_lea.vmem [#allocation13], %s1516
        // Predicated region
        $region108: #{tpu_custom_call.1} parent=83 // pred_check
          %p1518 = pneg %p412
        $region109: #{tpu_custom_call.1} parent=83 // pred_check_branch
          %1520 = sbr.rel (%p1518) target = $region111
        $region110: #{tpu_custom_call.1} parent=83 // pred_region
          %1522 = vsyncadd %s1514, 0
          %s1523 = smul.addr %s36, 2
          %s1524 = sadd.s32 %s37, %s1523
          %s1525 = smul.addr %s1524, 8
          %s1526 = scalar_lea.hbm %s16, %s1525
          %s1528 = sshll.u32 %s1517, 4
          %s1529 = int_to_ptr.vmem [resolvable:$true] %s1528
          %s1530 = sshll.u32 %s1526, 4
          %s1531 = int_to_ptr.hbm [resolvable:$true] %s1530
          %1533 = dma.vmem_to_hbm [thread:$0]  %s1529, 128, %s1531, %s1514
        $region111: #{tpu_custom_call.1} parent=83 // pred_fallthru
          _
      $region84: #{tpu_custom_call.1} parent=5 // pred_fallthru
        _
      %p1534 = scmp.le.s32.totalorder 2, %s27
      // Predicated region
      $region112: #{tpu_custom_call.1} parent=5 // pred_check
        %p1535 = pneg %p1534
      $region113: #{tpu_custom_call.1} parent=5 // pred_check_branch
        %1537 = sbr.rel (%p1535) target = $region115
      $region114: #{tpu_custom_call.1} parent=5 // pred_region
        %s1538 = ssub.s32 %s27, 2
        // Predicated region
        $region116: #{tpu_custom_call.1} parent=114 // pred_check
          %p1539 = pneg %p418
        $region117: #{tpu_custom_call.1} parent=114 // pred_check_branch
          %1541 = sbr.rel (%p1539) target = $region119
        $region118: #{tpu_custom_call.1} parent=114 // pred_region
          %s1542 = sand.u32 %s403, 1
          %s1543 = scalar_lea.sflag [#allocation9], %s1542
          %s1544 = sand.u32 %s403, 1
          %s1545 = smul.addr %s1544, 8
          %s1546 = scalar_lea.vmem [#allocation13], %s1545
          %1548 = dma.done %s1543, 128
        $region119: #{tpu_custom_call.1} parent=114 // pred_fallthru
          _
      $region115: #{tpu_custom_call.1} parent=5 // pred_fallthru
        _
    $region6: #{tpu_custom_call.1} parent=1 // loop_footer
      %s31 = sadd.s32 1, %s27
    $region7: #{tpu_custom_call.1} parent=1 // loop_footer_branch
      %26 = sbr.rel target = $region3
    $region8: #{tpu_custom_call.1} parent=1 // loop_exit
      _
    %1549 = vsyncpa [#allocation8], 1
    %s1550 = scalar_lea.sflag [#allocation8], 1
    %1551 = vsyncpa %s1550, 1
    %1552 = vsyncpa [#allocation11], 1
    %1553 = vsyncpa [#allocation9], 1
    %s1554 = scalar_lea.sflag [#allocation9], 1
    %1555 = vsyncpa %s1554, 1

</llo_original>
